<compile_context>
chip_gen: v5e
topology: v5e:2x2
jax: 0.10.0
libtpu: 0.0.40
codegen_flags: <defaults>
</compile_context>

<pallas_src>
import jax
import jax.numpy as jnp
from jax.experimental import pallas as pl
from jax.experimental.pallas import tpu as pltpu

K_IN = 28 * 28          # 784
K_PAD = 896             # 784 rounded up to a multiple of 128
N_OUT = 11
N_PAD = 128             # lane-dense output width


def _round_up(n, m):
    return ((n + m - 1) // m) * m


def mlp_kernel(x_ref, w1_ref, b1_ref, w2_ref, b2_ref, w3_ref, b3_ref,
               w4_ref, b4_ref, out_ref):
    # x tile: (TILE_M, 896) bf16; weights bf16; biases f32; out (TILE_M, 128) f32.
    x = x_ref[...]

    h = jnp.dot(x, w1_ref[...], preferred_element_type=jnp.float32)
    h = jnp.maximum(h + b1_ref[...], 0.0).astype(jnp.bfloat16)      # (tm, 512)

    h = jnp.dot(h, w2_ref[...], preferred_element_type=jnp.float32)
    h = jnp.maximum(h + b2_ref[...], 0.0).astype(jnp.bfloat16)      # (tm, 256)

    h = jnp.dot(h, w3_ref[...], preferred_element_type=jnp.float32)
    h = jnp.maximum(h + b3_ref[...], 0.0).astype(jnp.bfloat16)      # (tm, 128)

    h = jnp.dot(h, w4_ref[...], preferred_element_type=jnp.float32)
    out_ref[...] = h + b4_ref[...]                                   # (tm, 128)


def very_complex_nn_forward(x, params, tile_m=256):
    """x: (B, 1, 28, 28) float32 (NCHW). Returns (B, 11) float32 logits."""
    b = x.shape[0]
    x_flat = x.reshape(b, K_IN).astype(jnp.float32)        # torch.view(-1, 784)

    # Pick a batch tile: multiple of 8 sublanes, capped at tile_m; pad batch.
    tm = min(tile_m, _round_up(b, 8))
    b_pad = _round_up(b, tm)

    # Zero-pad K (784 -> 896) and batch, then cast activations to bf16.
    x_flat = jnp.pad(x_flat, ((0, b_pad - b), (0, K_PAD - K_IN)))
    x_bf = x_flat.astype(jnp.bfloat16)

    (w1, b1), (w2, b2), (w3, b3), (w4, b4) = params
    # bf16 weights; zero-pad w1 rows (K) and w4/b4 columns (N). Zeros don't
    # change the logits; output is sliced back to 11 below.
    w1p = jnp.pad(w1, ((0, K_PAD - w1.shape[0]), (0, 0))).astype(jnp.bfloat16)
    w2p = w2.astype(jnp.bfloat16)
    w3p = w3.astype(jnp.bfloat16)
    w4p = jnp.pad(w4, ((0, 0), (0, N_PAD - w4.shape[1]))).astype(jnp.bfloat16)
    b4p = jnp.pad(b4, ((0, 0), (0, N_PAD - b4.shape[1])))   # f32

    grid = (b_pad // tm,)
    resident = lambda a: pl.BlockSpec(a.shape, lambda i: (0, 0))  # DMA'd once

    out = pl.pallas_call(
        mlp_kernel,
        out_shape=jax.ShapeDtypeStruct((b_pad, N_PAD), jnp.float32),
        grid=grid,
        in_specs=[
            pl.BlockSpec((tm, K_PAD), lambda i: (i, 0)),   # x tile, pipelined
            resident(w1p), resident(b1),
            resident(w2p), resident(b2),
            resident(w3p), resident(b3),
            resident(w4p), resident(b4p),
        ],
        out_specs=pl.BlockSpec((tm, N_PAD), lambda i: (i, 0)),
        compiler_params=pltpu.CompilerParams(
            dimension_semantics=("parallel",),   # megacore sharding on v7x
            vmem_limit_bytes=16 << 20,
        ),
    )(x_bf, w1p, b1, w2p, b2, w3p, b3, w4p, b4p)

    return out[:b, :N_OUT]


def init_params(key):
    """Deterministic init mimicking PyTorch nn.Linear default (Kaiming-uniform
    bound = 1/sqrt(fan_in)). Weights stored transposed as (in, out) so the
    kernel computes y = x @ W + b == PyTorch's x @ weight.T + bias."""
    dims = [(K_IN, 512), (512, 256), (256, 128), (128, N_OUT)]
    params = []
    for (fan_in, fan_out) in dims:
        key, kw, kb = jax.random.split(key, 3)
        bound = 1.0 / jnp.sqrt(jnp.float32(fan_in))
        w = jax.random.uniform(kw, (fan_in, fan_out), jnp.float32, -bound, bound)
        bias = jax.random.uniform(kb, (fan_out,), jnp.float32, -bound, bound)
        params.append((w, bias.reshape(1, fan_out)))
    return params


def reference_forward(x, params):
    """Plain-JAX reference mirroring the kernel's bf16-weight numerics."""
    h = x.reshape(x.shape[0], -1).astype(jnp.bfloat16)
    for i, (w, bias) in enumerate(params):
        h = jnp.dot(h, w.astype(jnp.bfloat16),
                    preferred_element_type=jnp.float32) + bias
        if i < 3:
            h = jnp.maximum(h, 0.0)
            h = h.astype(jnp.bfloat16)
    return h


if __name__ == "__main__":
    key = jax.random.PRNGKey(0)
    key, kx = jax.random.split(key)

    # Small batch, MNIST-like single-channel 28x28 input (NCHW).
    x = jax.random.normal(kx, (2, 1, 28, 28), dtype=jnp.float32)
    params = init_params(key)

    out = very_complex_nn_forward(x, params)
    out = jax.block_until_ready(out)

    ref = reference_forward(x, params)
    assert out.shape == (2, N_OUT)
    assert jnp.allclose(out, ref, atol=1e-2, rtol=1e-2), (
        float(jnp.max(jnp.abs(out - ref))))

    print("KERNEL_OK")
</pallas_src>

<mosaic_0001>
module attributes {stable_mosaic.version = 11 : i64} {
  func.func @mlp_kernel(%arg0: i32, %arg1: memref<8x896xbf16, #tpu.memory_space<vmem>>, %arg2: memref<896x512xbf16, #tpu.memory_space<vmem>>, %arg3: memref<1x512xf32, #tpu.memory_space<vmem>>, %arg4: memref<512x256xbf16, #tpu.memory_space<vmem>>, %arg5: memref<1x256xf32, #tpu.memory_space<vmem>>, %arg6: memref<256x128xbf16, #tpu.memory_space<vmem>>, %arg7: memref<1x128xf32, #tpu.memory_space<vmem>>, %arg8: memref<128x128xbf16, #tpu.memory_space<vmem>>, %arg9: memref<1x128xf32, #tpu.memory_space<vmem>>, %arg10: memref<8x128xf32, #tpu.memory_space<vmem>>) attributes {dimension_semantics = [#tpu.dimension_semantics<parallel>], iteration_bounds = array<i64: 1>, scalar_prefetch = 0 : i64, scratch_operands = 0 : i64, tpu.core_type = #tpu.core_type<tc>, window_params = [{transform_indices = @transform_0, window_bounds = array<i64: 8, 896>}, {pipeline_mode = #tpu.pipeline_mode<synchronous>, transform_indices = @transform_1, window_bounds = array<i64: 896, 512>}, {pipeline_mode = #tpu.pipeline_mode<synchronous>, transform_indices = @transform_2, window_bounds = array<i64: 1, 512>}, {pipeline_mode = #tpu.pipeline_mode<synchronous>, transform_indices = @transform_3, window_bounds = array<i64: 512, 256>}, {pipeline_mode = #tpu.pipeline_mode<synchronous>, transform_indices = @transform_4, window_bounds = array<i64: 1, 256>}, {pipeline_mode = #tpu.pipeline_mode<synchronous>, transform_indices = @transform_5, window_bounds = array<i64: 256, 128>}, {pipeline_mode = #tpu.pipeline_mode<synchronous>, transform_indices = @transform_6, window_bounds = array<i64: 1, 128>}, {pipeline_mode = #tpu.pipeline_mode<synchronous>, transform_indices = @transform_7, window_bounds = array<i64: 128, 128>}, {pipeline_mode = #tpu.pipeline_mode<synchronous>, transform_indices = @transform_8, window_bounds = array<i64: 1, 128>}, {transform_indices = @transform_9, window_bounds = array<i64: 8, 128>}]} {
    %c0 = arith.constant 0 : index
    %c0_0 = arith.constant 0 : index
    %0 = vector.load %arg1[%c0, %c0_0] : memref<8x896xbf16, #tpu.memory_space<vmem>>, vector<8x896xbf16>
    %c0_1 = arith.constant 0 : index
    %c0_2 = arith.constant 0 : index
    %1 = vector.load %arg2[%c0_1, %c0_2] : memref<896x512xbf16, #tpu.memory_space<vmem>>, vector<896x512xbf16>
    %cst = arith.constant dense<0.000000e+00> : vector<8x512xf32>
    %2 = tpu.matmul %0, %1, %cst {dimension_numbers = #tpu.dot_dimension_numbers<[1], [0], [0], [1], [0, 0, 1, 1], [], []>} : vector<8x896xbf16>, vector<896x512xbf16>, vector<8x512xf32> -> vector<8x512xf32>
    %c0_3 = arith.constant 0 : index
    %c0_4 = arith.constant 0 : index
    %3 = vector.load %arg3[%c0_3, %c0_4] : memref<1x512xf32, #tpu.memory_space<vmem>>, vector<1x512xf32>
    %4 = vector.broadcast %3 : vector<1x512xf32> to vector<8x512xf32>
    %5 = arith.addf %2, %4 : vector<8x512xf32>
    %cst_5 = arith.constant 0.000000e+00 : f32
    %6 = vector.broadcast %cst_5 : f32 to vector<8x512xf32>
    %7 = arith.maximumf %5, %6 : vector<8x512xf32>
    %8 = arith.truncf %7 : vector<8x512xf32> to vector<8x512xbf16>
    %c0_6 = arith.constant 0 : index
    %c0_7 = arith.constant 0 : index
    %9 = vector.load %arg4[%c0_6, %c0_7] : memref<512x256xbf16, #tpu.memory_space<vmem>>, vector<512x256xbf16>
    %cst_8 = arith.constant dense<0.000000e+00> : vector<8x256xf32>
    %10 = tpu.matmul %8, %9, %cst_8 {dimension_numbers = #tpu.dot_dimension_numbers<[1], [0], [0], [1], [0, 0, 1, 1], [], []>} : vector<8x512xbf16>, vector<512x256xbf16>, vector<8x256xf32> -> vector<8x256xf32>
    %c0_9 = arith.constant 0 : index
    %c0_10 = arith.constant 0 : index
    %11 = vector.load %arg5[%c0_9, %c0_10] : memref<1x256xf32, #tpu.memory_space<vmem>>, vector<1x256xf32>
    %12 = vector.broadcast %11 : vector<1x256xf32> to vector<8x256xf32>
    %13 = arith.addf %10, %12 : vector<8x256xf32>
    %cst_11 = arith.constant 0.000000e+00 : f32
    %14 = vector.broadcast %cst_11 : f32 to vector<8x256xf32>
    %15 = arith.maximumf %13, %14 : vector<8x256xf32>
    %16 = arith.truncf %15 : vector<8x256xf32> to vector<8x256xbf16>
    %c0_12 = arith.constant 0 : index
    %c0_13 = arith.constant 0 : index
    %17 = vector.load %arg6[%c0_12, %c0_13] : memref<256x128xbf16, #tpu.memory_space<vmem>>, vector<256x128xbf16>
    %cst_14 = arith.constant dense<0.000000e+00> : vector<8x128xf32>
    %18 = tpu.matmul %16, %17, %cst_14 {dimension_numbers = #tpu.dot_dimension_numbers<[1], [0], [0], [1], [0, 0, 1, 1], [], []>} : vector<8x256xbf16>, vector<256x128xbf16>, vector<8x128xf32> -> vector<8x128xf32>
    %c0_15 = arith.constant 0 : index
    %c0_16 = arith.constant 0 : index
    %19 = vector.load %arg7[%c0_15, %c0_16] : memref<1x128xf32, #tpu.memory_space<vmem>>, vector<1x128xf32>
    %20 = vector.broadcast %19 : vector<1x128xf32> to vector<8x128xf32>
    %21 = arith.addf %18, %20 : vector<8x128xf32>
    %cst_17 = arith.constant 0.000000e+00 : f32
    %22 = vector.broadcast %cst_17 : f32 to vector<8x128xf32>
    %23 = arith.maximumf %21, %22 : vector<8x128xf32>
    %24 = arith.truncf %23 : vector<8x128xf32> to vector<8x128xbf16>
    %c0_18 = arith.constant 0 : index
    %c0_19 = arith.constant 0 : index
    %25 = vector.load %arg8[%c0_18, %c0_19] : memref<128x128xbf16, #tpu.memory_space<vmem>>, vector<128x128xbf16>
    %cst_20 = arith.constant dense<0.000000e+00> : vector<8x128xf32>
    %26 = tpu.matmul %24, %25, %cst_20 {dimension_numbers = #tpu.dot_dimension_numbers<[1], [0], [0], [1], [0, 0, 1, 1], [], []>} : vector<8x128xbf16>, vector<128x128xbf16>, vector<8x128xf32> -> vector<8x128xf32>
    %c0_21 = arith.constant 0 : index
    %c0_22 = arith.constant 0 : index
    %27 = vector.load %arg9[%c0_21, %c0_22] : memref<1x128xf32, #tpu.memory_space<vmem>>, vector<1x128xf32>
    %28 = vector.broadcast %27 : vector<1x128xf32> to vector<8x128xf32>
    %29 = arith.addf %26, %28 : vector<8x128xf32>
    %c0_23 = arith.constant 0 : index
    %c0_24 = arith.constant 0 : index
    %30 = vector.load %arg10[%c0_23, %c0_24] : memref<8x128xf32, #tpu.memory_space<vmem>>, vector<8x128xf32>
    tpu.vector_store %arg10[%c0_23, %c0_24], %29 {strides = array<i32>} : memref<8x128xf32, #tpu.memory_space<vmem>>, vector<8x128xf32>,
    return
  }
  func.func @transform_0(%arg0: i32) -> (i32, i32) {
    %c0_i32 = arith.constant 0 : i32
    %c0_i32_0 = arith.constant 0 : i32
    return %arg0, %c0_i32 : i32, i32
  }
  func.func @transform_1(%arg0: i32) -> (i32, i32) {
    %c0_i32 = arith.constant 0 : i32
    %c0_i32_0 = arith.constant 0 : i32
    %c0_i32_1 = arith.constant 0 : i32
    return %c0_i32, %c0_i32_0 : i32, i32
  }
  func.func @transform_2(%arg0: i32) -> (i32, i32) {
    %c0_i32 = arith.constant 0 : i32
    %c0_i32_0 = arith.constant 0 : i32
    %c0_i32_1 = arith.constant 0 : i32
    return %c0_i32, %c0_i32_0 : i32, i32
  }
  func.func @transform_3(%arg0: i32) -> (i32, i32) {
    %c0_i32 = arith.constant 0 : i32
    %c0_i32_0 = arith.constant 0 : i32
    %c0_i32_1 = arith.constant 0 : i32
    return %c0_i32, %c0_i32_0 : i32, i32
  }
  func.func @transform_4(%arg0: i32) -> (i32, i32) {
    %c0_i32 = arith.constant 0 : i32
    %c0_i32_0 = arith.constant 0 : i32
    %c0_i32_1 = arith.constant 0 : i32
    return %c0_i32, %c0_i32_0 : i32, i32
  }
  func.func @transform_5(%arg0: i32) -> (i32, i32) {
    %c0_i32 = arith.constant 0 : i32
    %c0_i32_0 = arith.constant 0 : i32
    %c0_i32_1 = arith.constant 0 : i32
    return %c0_i32, %c0_i32_0 : i32, i32
  }
  func.func @transform_6(%arg0: i32) -> (i32, i32) {
    %c0_i32 = arith.constant 0 : i32
    %c0_i32_0 = arith.constant 0 : i32
    %c0_i32_1 = arith.constant 0 : i32
    return %c0_i32, %c0_i32_0 : i32, i32
  }
  func.func @transform_7(%arg0: i32) -> (i32, i32) {
    %c0_i32 = arith.constant 0 : i32
    %c0_i32_0 = arith.constant 0 : i32
    %c0_i32_1 = arith.constant 0 : i32
    return %c0_i32, %c0_i32_0 : i32, i32
  }
  func.func @transform_8(%arg0: i32) -> (i32, i32) {
    %c0_i32 = arith.constant 0 : i32
    %c0_i32_0 = arith.constant 0 : i32
    %c0_i32_1 = arith.constant 0 : i32
    return %c0_i32, %c0_i32_0 : i32, i32
  }
  func.func @transform_9(%arg0: i32) -> (i32, i32) {
    %c0_i32 = arith.constant 0 : i32
    %c0_i32_0 = arith.constant 0 : i32
    return %arg0, %c0_i32 : i32, i32
  }
}

</mosaic_0001>

<llo_original>
// kernel: tpu_custom_call.1
$region0: #{tpu_custom_call.1}
  #allocation0 [shape = 'u32[]', space=smem, size = 0x4, offset = 0x4, fixed_abs, tag = 'smem constant byte address 0x4 - core index']
  #allocation1 [shape = 'u32[72,128]{1,0:T(1,128)}', space=vmem, size = 0x9000, scoped, tag = 'internal scratch']
  %s0 = inlined_call_operand.hbm [shape: bf16[8,896], index: 0, kind: input, shape index: {}]
  %s1 = inlined_call_operand.hbm [shape: bf16[896,512], index: 1, kind: input, shape index: {}]
  %s2 = inlined_call_operand.hbm [shape: f32[1,512], index: 2, kind: input, shape index: {}]
  %s3 = inlined_call_operand.hbm [shape: bf16[512,256], index: 3, kind: input, shape index: {}]
  %s4 = inlined_call_operand.vmem [shape: f32[1,256], index: 4, kind: input, shape index: {}]
  %s5 = inlined_call_operand.hbm [shape: bf16[256,128], index: 5, kind: input, shape index: {}]
  %s6 = inlined_call_operand.vmem [shape: f32[1,128], index: 6, kind: input, shape index: {}]
  %s7 = inlined_call_operand.hbm [shape: bf16[128,128], index: 7, kind: input, shape index: {}]
  %s8 = inlined_call_operand.vmem [shape: f32[1,128], index: 8, kind: input, shape index: {}]
  %s9 = inlined_call_operand.hbm [shape: f32[8,128], index: 9, kind: output, shape index: {}]
  %s10 = sld [smem:[#allocation0]]
  $region70: #{tpu_custom_call.1} parent=0
    _
  %s12 = ssub.s32 1, %s10
  %s13 = scalar_select 0, %s12, %s10
  $region1: #{tpu_custom_call.1} parent=0
    #allocation2 [shape = 'u8[14336]{0}', space=vmem, size = 0x3800, scoped, tag = 'input window, operand 0, single buffered']
    #allocation3 [shape = 's32[1]{0}', space=sflag, size = 0x4, scoped, tag = 'scoped memory for tpu_custom_call.1']
    #allocation4 [shape = 's32[1]{0}', space=sflag, size = 0x4, scoped, tag = 'scoped memory for tpu_custom_call.1']
    #allocation5 [shape = 'u8[917504]{0}', space=vmem, size = 0xe0000, scoped, tag = 'input window, operand 1, single buffered']
    #allocation6 [shape = 's32[1]{0}', space=sflag, size = 0x4, scoped, tag = 'scoped memory for tpu_custom_call.1']
    #allocation7 [shape = 'u8[2048]{0}', space=vmem, size = 0x800, scoped, tag = 'input window, operand 2, single buffered']
    #allocation8 [shape = 'u8[262144]{0}', space=vmem, size = 0x40000, scoped, tag = 'input window, operand 3, single buffered']
    #allocation9 [shape = 's32[1]{0}', space=sflag, size = 0x4, scoped, tag = 'scoped memory for tpu_custom_call.1']
    #allocation10 [shape = 'u8[65536]{0}', space=vmem, size = 0x10000, scoped, tag = 'input window, operand 5, single buffered']
    #allocation11 [shape = 'u8[32768]{0}', space=vmem, size = 0x8000, scoped, tag = 'input window, operand 7, single buffered']
    #allocation12 [shape = 's32[1]{0}', space=sflag, size = 0x4, scoped, tag = 'scoped memory for tpu_custom_call.1']
    #allocation13 [shape = 'u8[4096]{0}', space=vmem, size = 0x1000, scoped, tag = 'output window, operand 0, single buffered']
    %14 = vsyncpa [#allocation3], 0
    %15 = vsyncpa [#allocation6], 0
    %16 = vsyncpa [#allocation9], 0
    %17 = vsyncpa [#allocation12], 0
    %18 = vsyncpa [#allocation4], 0
    // Predicated region
    $region2: #{tpu_custom_call.1} parent=1 // pred_check
      _
    $region3: #{tpu_custom_call.1} parent=1 // pred_check_branch
      %20 = sbr.rel (0) target = $region5
    $region4: #{tpu_custom_call.1} parent=1 // pred_region
      %22 = vsyncadd [#allocation3], 0
      %s24 = sshll.u32 %s0, 4
      %s25 = int_to_ptr.hbm [resolvable:$true] %s24
      %s26 = sshll.u32 [#allocation2], 4
      %s27 = int_to_ptr.vmem [resolvable:$true] %s26
      %29 = dma.hbm_to_vmem [thread:$0]  %s25, 448, %s27, [#allocation3]
    $region5: #{tpu_custom_call.1} parent=1 // pred_fallthru
      _
    // Predicated region
    $region6: #{tpu_custom_call.1} parent=1 // pred_check
      _
    $region7: #{tpu_custom_call.1} parent=1 // pred_check_branch
      %31 = sbr.rel (0) target = $region9
    $region8: #{tpu_custom_call.1} parent=1 // pred_region
      %33 = vsyncadd [#allocation6], 0
      %s34 = sshll.u32 %s1, 4
      %s35 = int_to_ptr.hbm [resolvable:$true] %s34
      %s36 = sshll.u32 [#allocation5], 4
      %s37 = int_to_ptr.vmem [resolvable:$true] %s36
      %42 = dma.hbm_to_vmem [thread:$0]  %s35, 28672, %s37, [#allocation6], 256, 256, 16
    $region9: #{tpu_custom_call.1} parent=1 // pred_fallthru
      _
    // Predicated region
    $region10: #{tpu_custom_call.1} parent=1 // pred_check
      _
    $region11: #{tpu_custom_call.1} parent=1 // pred_check_branch
      %44 = sbr.rel (0) target = $region13
    $region12: #{tpu_custom_call.1} parent=1 // pred_region
      %46 = vsyncadd [#allocation6], 0
      %s48 = sshll.u32 %s2, 4
      %s49 = int_to_ptr.hbm [resolvable:$true] %s48
      %s50 = sshll.u32 [#allocation7], 4
      %s51 = int_to_ptr.vmem [resolvable:$true] %s50
      %53 = dma.hbm_to_vmem [thread:$0]  %s49, 64, %s51, [#allocation6]
    $region13: #{tpu_custom_call.1} parent=1 // pred_fallthru
      _
    // Predicated region
    $region14: #{tpu_custom_call.1} parent=1 // pred_check
      _
    $region15: #{tpu_custom_call.1} parent=1 // pred_check_branch
      %55 = sbr.rel (0) target = $region17
    $region16: #{tpu_custom_call.1} parent=1 // pred_region
      %57 = vsyncadd [#allocation9], 0
      %s58 = sshll.u32 %s3, 4
      %s59 = int_to_ptr.hbm [resolvable:$true] %s58
      %s60 = sshll.u32 [#allocation8], 4
      %s61 = int_to_ptr.vmem [resolvable:$true] %s60
      %66 = dma.hbm_to_vmem [thread:$0]  %s59, 8192, %s61, [#allocation9], 128, 128, 8
    $region17: #{tpu_custom_call.1} parent=1 // pred_fallthru
      _
    // Predicated region
    $region18: #{tpu_custom_call.1} parent=1 // pred_check
      _
    $region19: #{tpu_custom_call.1} parent=1 // pred_check_branch
      %68 = sbr.rel (0) target = $region21
    $region20: #{tpu_custom_call.1} parent=1 // pred_region
      _
    $region21: #{tpu_custom_call.1} parent=1 // pred_fallthru
      _
    // Predicated region
    $region22: #{tpu_custom_call.1} parent=1 // pred_check
      _
    $region23: #{tpu_custom_call.1} parent=1 // pred_check_branch
      %70 = sbr.rel (0) target = $region25
    $region24: #{tpu_custom_call.1} parent=1 // pred_region
      %72 = vsyncadd [#allocation9], 0
      %s73 = sshll.u32 %s5, 4
      %s74 = int_to_ptr.hbm [resolvable:$true] %s73
      %s75 = sshll.u32 [#allocation10], 4
      %s76 = int_to_ptr.vmem [resolvable:$true] %s75
      %81 = dma.hbm_to_vmem [thread:$0]  %s74, 2048, %s76, [#allocation9], 64, 64, 4
    $region25: #{tpu_custom_call.1} parent=1 // pred_fallthru
      _
    // Predicated region
    $region26: #{tpu_custom_call.1} parent=1 // pred_check
      _
    $region27: #{tpu_custom_call.1} parent=1 // pred_check_branch
      %83 = sbr.rel (0) target = $region29
    $region28: #{tpu_custom_call.1} parent=1 // pred_region
      _
    $region29: #{tpu_custom_call.1} parent=1 // pred_fallthru
      _
    // Predicated region
    $region30: #{tpu_custom_call.1} parent=1 // pred_check
      _
    $region31: #{tpu_custom_call.1} parent=1 // pred_check_branch
      %85 = sbr.rel (0) target = $region33
    $region32: #{tpu_custom_call.1} parent=1 // pred_region
      %87 = vsyncadd [#allocation12], 0
      %s88 = sshll.u32 %s7, 4
      %s89 = int_to_ptr.hbm [resolvable:$true] %s88
      %s90 = sshll.u32 [#allocation11], 4
      %s91 = int_to_ptr.vmem [resolvable:$true] %s90
      %96 = dma.hbm_to_vmem [thread:$0]  %s89, 1024, %s91, [#allocation12], 64, 64, 4
    $region33: #{tpu_custom_call.1} parent=1 // pred_fallthru
      _
    // Predicated region
    $region34: #{tpu_custom_call.1} parent=1 // pred_check
      _
    $region35: #{tpu_custom_call.1} parent=1 // pred_check_branch
      %98 = sbr.rel (0) target = $region37
    $region36: #{tpu_custom_call.1} parent=1 // pred_region
      _
    $region37: #{tpu_custom_call.1} parent=1 // pred_fallthru
      _
    // Predicated region
    $region38: #{tpu_custom_call.1} parent=1 // pred_check
      _
    $region39: #{tpu_custom_call.1} parent=1 // pred_check_branch
      %100 = sbr.rel (0) target = $region41
    $region40: #{tpu_custom_call.1} parent=1 // pred_region
      %102 = dma.done [#allocation3], 448
    $region41: #{tpu_custom_call.1} parent=1 // pred_fallthru
      _
    // Predicated region
    $region42: #{tpu_custom_call.1} parent=1 // pred_check
      _
    $region43: #{tpu_custom_call.1} parent=1 // pred_check_branch
      %104 = sbr.rel (0) target = $region45
    $region44: #{tpu_custom_call.1} parent=1 // pred_region
      %106 = dma.done [#allocation6], 28672
    $region45: #{tpu_custom_call.1} parent=1 // pred_fallthru
      _
    // Predicated region
    $region46: #{tpu_custom_call.1} parent=1 // pred_check
      _
    $region47: #{tpu_custom_call.1} parent=1 // pred_check_branch
      %108 = sbr.rel (0) target = $region49
    $region48: #{tpu_custom_call.1} parent=1 // pred_region
      %110 = dma.done [#allocation6], 64
    $region49: #{tpu_custom_call.1} parent=1 // pred_fallthru
      _
    // Predicated region
    $region50: #{tpu_custom_call.1} parent=1 // pred_check
      _
    $region51: #{tpu_custom_call.1} parent=1 // pred_check_branch
      %112 = sbr.rel (0) target = $region53
    $region52: #{tpu_custom_call.1} parent=1 // pred_region
      %114 = dma.done [#allocation9], 8192
    $region53: #{tpu_custom_call.1} parent=1 // pred_fallthru
      _
    // Predicated region
    $region54: #{tpu_custom_call.1} parent=1 // pred_check
      _
    $region55: #{tpu_custom_call.1} parent=1 // pred_check_branch
      %116 = sbr.rel (0) target = $region57
    $region56: #{tpu_custom_call.1} parent=1 // pred_region
      %118 = dma.done [#allocation9], 2048
    $region57: #{tpu_custom_call.1} parent=1 // pred_fallthru
      _
    // Predicated region
    $region58: #{tpu_custom_call.1} parent=1 // pred_check
      _
    $region59: #{tpu_custom_call.1} parent=1 // pred_check_branch
      %120 = sbr.rel (0) target = $region61
    $region60: #{tpu_custom_call.1} parent=1 // pred_region
      %122 = dma.done [#allocation12], 1024
    $region61: #{tpu_custom_call.1} parent=1 // pred_fallthru
      _
    %v123 = vld [vmem:[#allocation2] sm:$0xff]
    %v124 = vld [vmem:[#allocation2 + $0x8] sm:$0xff]
    %v125 = vld [vmem:[#allocation2 + $0x10] sm:$0xff]
    %v126 = vld [vmem:[#allocation2 + $0x18] sm:$0xf]
    %v127 = vld [vmem:[#allocation5] sm:$0xff]
    %v128 = vld [vmem:[#allocation5 + $0x8] sm:$0xff]
    %v129 = vld [vmem:[#allocation5 + $0x10] sm:$0xff]
    %v130 = vld [vmem:[#allocation5 + $0x18] sm:$0xff]
    %v131 = vld [vmem:[#allocation5 + $0x20] sm:$0xff]
    %v132 = vld [vmem:[#allocation5 + $0x28] sm:$0xff]
    %v133 = vld [vmem:[#allocation5 + $0x30] sm:$0xff]
    %v134 = vld [vmem:[#allocation5 + $0x38] sm:$0xff]
    %v135 = vld [vmem:[#allocation5 + $0x40] sm:$0xff]
    %v136 = vld [vmem:[#allocation5 + $0x48] sm:$0xff]
    %v137 = vld [vmem:[#allocation5 + $0x50] sm:$0xff]
    %v138 = vld [vmem:[#allocation5 + $0x58] sm:$0xff]
    %v139 = vld [vmem:[#allocation5 + $0x60] sm:$0xff]
    %v140 = vld [vmem:[#allocation5 + $0x68] sm:$0xff]
    %v141 = vld [vmem:[#allocation5 + $0x70] sm:$0xff]
    %v142 = vld [vmem:[#allocation5 + $0x78] sm:$0xff]
    %v143 = vld [vmem:[#allocation5 + $0x80] sm:$0xff]
    %v144 = vld [vmem:[#allocation5 + $0x88] sm:$0xff]
    %v145 = vld [vmem:[#allocation5 + $0x90] sm:$0xff]
    %v146 = vld [vmem:[#allocation5 + $0x98] sm:$0xff]
    %v147 = vld [vmem:[#allocation5 + $0xa0] sm:$0xff]
    %v148 = vld [vmem:[#allocation5 + $0xa8] sm:$0xff]
    %v149 = vld [vmem:[#allocation5 + $0xb0] sm:$0xff]
    %v150 = vld [vmem:[#allocation5 + $0xb8] sm:$0xff]
    %v151 = vld [vmem:[#allocation5 + $0xc0] sm:$0xff]
    %v152 = vld [vmem:[#allocation5 + $0xc8] sm:$0xff]
    %v153 = vld [vmem:[#allocation5 + $0xd0] sm:$0xff]
    %v154 = vld [vmem:[#allocation5 + $0xd8] sm:$0xff]
    %v155 = vld [vmem:[#allocation5 + $0xe0] sm:$0xff]
    %v156 = vld [vmem:[#allocation5 + $0xe8] sm:$0xff]
    %v157 = vld [vmem:[#allocation5 + $0xf0] sm:$0xff]
    %v158 = vld [vmem:[#allocation5 + $0xf8] sm:$0xff]
    %v159 = vld [vmem:[#allocation5 + $0x100] sm:$0xff]
    %v160 = vld [vmem:[#allocation5 + $0x108] sm:$0xff]
    %v161 = vld [vmem:[#allocation5 + $0x110] sm:$0xff]
    %v162 = vld [vmem:[#allocation5 + $0x118] sm:$0xff]
    %v163 = vld [vmem:[#allocation5 + $0x120] sm:$0xff]
    %v164 = vld [vmem:[#allocation5 + $0x128] sm:$0xff]
    %v165 = vld [vmem:[#allocation5 + $0x130] sm:$0xff]
    %v166 = vld [vmem:[#allocation5 + $0x138] sm:$0xff]
    %v167 = vld [vmem:[#allocation5 + $0x140] sm:$0xff]
    %v168 = vld [vmem:[#allocation5 + $0x148] sm:$0xff]
    %v169 = vld [vmem:[#allocation5 + $0x150] sm:$0xff]
    %v170 = vld [vmem:[#allocation5 + $0x158] sm:$0xff]
    %v171 = vld [vmem:[#allocation5 + $0x160] sm:$0xff]
    %v172 = vld [vmem:[#allocation5 + $0x168] sm:$0xff]
    %v173 = vld [vmem:[#allocation5 + $0x170] sm:$0xff]
    %v174 = vld [vmem:[#allocation5 + $0x178] sm:$0xff]
    %v175 = vld [vmem:[#allocation5 + $0x180] sm:$0xff]
    %v176 = vld [vmem:[#allocation5 + $0x188] sm:$0xff]
    %v177 = vld [vmem:[#allocation5 + $0x190] sm:$0xff]
    %v178 = vld [vmem:[#allocation5 + $0x198] sm:$0xff]
    %v179 = vld [vmem:[#allocation5 + $0x1a0] sm:$0xff]
    %v180 = vld [vmem:[#allocation5 + $0x1a8] sm:$0xff]
    %v181 = vld [vmem:[#allocation5 + $0x1b0] sm:$0xff]
    %v182 = vld [vmem:[#allocation5 + $0x1b8] sm:$0xff]
    %v183 = vld [vmem:[#allocation5 + $0x1c0] sm:$0xff]
    %v184 = vld [vmem:[#allocation5 + $0x1c8] sm:$0xff]
    %v185 = vld [vmem:[#allocation5 + $0x1d0] sm:$0xff]
    %v186 = vld [vmem:[#allocation5 + $0x1d8] sm:$0xff]
    %v187 = vld [vmem:[#allocation5 + $0x1e0] sm:$0xff]
    %v188 = vld [vmem:[#allocation5 + $0x1e8] sm:$0xff]
    %v189 = vld [vmem:[#allocation5 + $0x1f0] sm:$0xff]
    %v190 = vld [vmem:[#allocation5 + $0x1f8] sm:$0xff]
    %v191 = vld [vmem:[#allocation5 + $0x200] sm:$0xff]
    %v192 = vld [vmem:[#allocation5 + $0x208] sm:$0xff]
    %v193 = vld [vmem:[#allocation5 + $0x210] sm:$0xff]
    %v194 = vld [vmem:[#allocation5 + $0x218] sm:$0xff]
    %v195 = vld [vmem:[#allocation5 + $0x220] sm:$0xff]
    %v196 = vld [vmem:[#allocation5 + $0x228] sm:$0xff]
    %v197 = vld [vmem:[#allocation5 + $0x230] sm:$0xff]
    %v198 = vld [vmem:[#allocation5 + $0x238] sm:$0xff]
    %v199 = vld [vmem:[#allocation5 + $0x240] sm:$0xff]
    %v200 = vld [vmem:[#allocation5 + $0x248] sm:$0xff]
    %v201 = vld [vmem:[#allocation5 + $0x250] sm:$0xff]
    %v202 = vld [vmem:[#allocation5 + $0x258] sm:$0xff]
    %v203 = vld [vmem:[#allocation5 + $0x260] sm:$0xff]
    %v204 = vld [vmem:[#allocation5 + $0x268] sm:$0xff]
    %v205 = vld [vmem:[#allocation5 + $0x270] sm:$0xff]
    %v206 = vld [vmem:[#allocation5 + $0x278] sm:$0xff]
    %v207 = vld [vmem:[#allocation5 + $0x280] sm:$0xff]
    %v208 = vld [vmem:[#allocation5 + $0x288] sm:$0xff]
    %v209 = vld [vmem:[#allocation5 + $0x290] sm:$0xff]
    %v210 = vld [vmem:[#allocation5 + $0x298] sm:$0xff]
    %v211 = vld [vmem:[#allocation5 + $0x2a0] sm:$0xff]
    %v212 = vld [vmem:[#allocation5 + $0x2a8] sm:$0xff]
    %v213 = vld [vmem:[#allocation5 + $0x2b0] sm:$0xff]
    %v214 = vld [vmem:[#allocation5 + $0x2b8] sm:$0xff]
    %v215 = vld [vmem:[#allocation5 + $0x2c0] sm:$0xff]
    %v216 = vld [vmem:[#allocation5 + $0x2c8] sm:$0xff]
    %v217 = vld [vmem:[#allocation5 + $0x2d0] sm:$0xff]
    %v218 = vld [vmem:[#allocation5 + $0x2d8] sm:$0xff]
    %v219 = vld [vmem:[#allocation5 + $0x2e0] sm:$0xff]
    %v220 = vld [vmem:[#allocation5 + $0x2e8] sm:$0xff]
    %v221 = vld [vmem:[#allocation5 + $0x2f0] sm:$0xff]
    %v222 = vld [vmem:[#allocation5 + $0x2f8] sm:$0xff]
    %v223 = vld [vmem:[#allocation5 + $0x300] sm:$0xff]
    %v224 = vld [vmem:[#allocation5 + $0x308] sm:$0xff]
    %v225 = vld [vmem:[#allocation5 + $0x310] sm:$0xff]
    %v226 = vld [vmem:[#allocation5 + $0x318] sm:$0xff]
    %v227 = vld [vmem:[#allocation5 + $0x320] sm:$0xff]
    %v228 = vld [vmem:[#allocation5 + $0x328] sm:$0xff]
    %v229 = vld [vmem:[#allocation5 + $0x330] sm:$0xff]
    %v230 = vld [vmem:[#allocation5 + $0x338] sm:$0xff]
    %v231 = vld [vmem:[#allocation5 + $0x340] sm:$0xff]
    %v232 = vld [vmem:[#allocation5 + $0x348] sm:$0xff]
    %v233 = vld [vmem:[#allocation5 + $0x350] sm:$0xff]
    %v234 = vld [vmem:[#allocation5 + $0x358] sm:$0xff]
    %v235 = vld [vmem:[#allocation5 + $0x360] sm:$0xff]
    %v236 = vld [vmem:[#allocation5 + $0x368] sm:$0xff]
    %v237 = vld [vmem:[#allocation5 + $0x370] sm:$0xff]
    %v238 = vld [vmem:[#allocation5 + $0x378] sm:$0xff]
    %v239 = vld [vmem:[#allocation5 + $0x380] sm:$0xff]
    %v240 = vld [vmem:[#allocation5 + $0x388] sm:$0xff]
    %v241 = vld [vmem:[#allocation5 + $0x390] sm:$0xff]
    %v242 = vld [vmem:[#allocation5 + $0x398] sm:$0xff]
    %v243 = vld [vmem:[#allocation5 + $0x3a0] sm:$0xff]
    %v244 = vld [vmem:[#allocation5 + $0x3a8] sm:$0xff]
    %v245 = vld [vmem:[#allocation5 + $0x3b0] sm:$0xff]
    %v246 = vld [vmem:[#allocation5 + $0x3b8] sm:$0xff]
    %v247 = vld [vmem:[#allocation5 + $0x3c0] sm:$0xff]
    %v248 = vld [vmem:[#allocation5 + $0x3c8] sm:$0xff]
    %v249 = vld [vmem:[#allocation5 + $0x3d0] sm:$0xff]
    %v250 = vld [vmem:[#allocation5 + $0x3d8] sm:$0xff]
    %v251 = vld [vmem:[#allocation5 + $0x3e0] sm:$0xff]
    %v252 = vld [vmem:[#allocation5 + $0x3e8] sm:$0xff]
    %v253 = vld [vmem:[#allocation5 + $0x3f0] sm:$0xff]
    %v254 = vld [vmem:[#allocation5 + $0x3f8] sm:$0xff]
    %v255 = vld [vmem:[#allocation5 + $0x400] sm:$0xff]
    %v256 = vld [vmem:[#allocation5 + $0x408] sm:$0xff]
    %v257 = vld [vmem:[#allocation5 + $0x410] sm:$0xff]
    %v258 = vld [vmem:[#allocation5 + $0x418] sm:$0xff]
    %v259 = vld [vmem:[#allocation5 + $0x420] sm:$0xff]
    %v260 = vld [vmem:[#allocation5 + $0x428] sm:$0xff]
    %v261 = vld [vmem:[#allocation5 + $0x430] sm:$0xff]
    %v262 = vld [vmem:[#allocation5 + $0x438] sm:$0xff]
    %v263 = vld [vmem:[#allocation5 + $0x440] sm:$0xff]
    %v264 = vld [vmem:[#allocation5 + $0x448] sm:$0xff]
    %v265 = vld [vmem:[#allocation5 + $0x450] sm:$0xff]
    %v266 = vld [vmem:[#allocation5 + $0x458] sm:$0xff]
    %v267 = vld [vmem:[#allocation5 + $0x460] sm:$0xff]
    %v268 = vld [vmem:[#allocation5 + $0x468] sm:$0xff]
    %v269 = vld [vmem:[#allocation5 + $0x470] sm:$0xff]
    %v270 = vld [vmem:[#allocation5 + $0x478] sm:$0xff]
    %v271 = vld [vmem:[#allocation5 + $0x480] sm:$0xff]
    %v272 = vld [vmem:[#allocation5 + $0x488] sm:$0xff]
    %v273 = vld [vmem:[#allocation5 + $0x490] sm:$0xff]
    %v274 = vld [vmem:[#allocation5 + $0x498] sm:$0xff]
    %v275 = vld [vmem:[#allocation5 + $0x4a0] sm:$0xff]
    %v276 = vld [vmem:[#allocation5 + $0x4a8] sm:$0xff]
    %v277 = vld [vmem:[#allocation5 + $0x4b0] sm:$0xff]
    %v278 = vld [vmem:[#allocation5 + $0x4b8] sm:$0xff]
    %v279 = vld [vmem:[#allocation5 + $0x4c0] sm:$0xff]
    %v280 = vld [vmem:[#allocation5 + $0x4c8] sm:$0xff]
    %v281 = vld [vmem:[#allocation5 + $0x4d0] sm:$0xff]
    %v282 = vld [vmem:[#allocation5 + $0x4d8] sm:$0xff]
    %v283 = vld [vmem:[#allocation5 + $0x4e0] sm:$0xff]
    %v284 = vld [vmem:[#allocation5 + $0x4e8] sm:$0xff]
    %v285 = vld [vmem:[#allocation5 + $0x4f0] sm:$0xff]
    %v286 = vld [vmem:[#allocation5 + $0x4f8] sm:$0xff]
    %v287 = vld [vmem:[#allocation5 + $0x500] sm:$0xff]
    %v288 = vld [vmem:[#allocation5 + $0x508] sm:$0xff]
    %v289 = vld [vmem:[#allocation5 + $0x510] sm:$0xff]
    %v290 = vld [vmem:[#allocation5 + $0x518] sm:$0xff]
    %v291 = vld [vmem:[#allocation5 + $0x520] sm:$0xff]
    %v292 = vld [vmem:[#allocation5 + $0x528] sm:$0xff]
    %v293 = vld [vmem:[#allocation5 + $0x530] sm:$0xff]
    %v294 = vld [vmem:[#allocation5 + $0x538] sm:$0xff]
    %v295 = vld [vmem:[#allocation5 + $0x540] sm:$0xff]
    %v296 = vld [vmem:[#allocation5 + $0x548] sm:$0xff]
    %v297 = vld [vmem:[#allocation5 + $0x550] sm:$0xff]
    %v298 = vld [vmem:[#allocation5 + $0x558] sm:$0xff]
    %v299 = vld [vmem:[#allocation5 + $0x560] sm:$0xff]
    %v300 = vld [vmem:[#allocation5 + $0x568] sm:$0xff]
    %v301 = vld [vmem:[#allocation5 + $0x570] sm:$0xff]
    %v302 = vld [vmem:[#allocation5 + $0x578] sm:$0xff]
    %v303 = vld [vmem:[#allocation5 + $0x580] sm:$0xff]
    %v304 = vld [vmem:[#allocation5 + $0x588] sm:$0xff]
    %v305 = vld [vmem:[#allocation5 + $0x590] sm:$0xff]
    %v306 = vld [vmem:[#allocation5 + $0x598] sm:$0xff]
    %v307 = vld [vmem:[#allocation5 + $0x5a0] sm:$0xff]
    %v308 = vld [vmem:[#allocation5 + $0x5a8] sm:$0xff]
    %v309 = vld [vmem:[#allocation5 + $0x5b0] sm:$0xff]
    %v310 = vld [vmem:[#allocation5 + $0x5b8] sm:$0xff]
    %v311 = vld [vmem:[#allocation5 + $0x5c0] sm:$0xff]
    %v312 = vld [vmem:[#allocation5 + $0x5c8] sm:$0xff]
    %v313 = vld [vmem:[#allocation5 + $0x5d0] sm:$0xff]
    %v314 = vld [vmem:[#allocation5 + $0x5d8] sm:$0xff]
    %v315 = vld [vmem:[#allocation5 + $0x5e0] sm:$0xff]
    %v316 = vld [vmem:[#allocation5 + $0x5e8] sm:$0xff]
    %v317 = vld [vmem:[#allocation5 + $0x5f0] sm:$0xff]
    %v318 = vld [vmem:[#allocation5 + $0x5f8] sm:$0xff]
    %v319 = vld [vmem:[#allocation5 + $0x600] sm:$0xff]
    %v320 = vld [vmem:[#allocation5 + $0x608] sm:$0xff]
    %v321 = vld [vmem:[#allocation5 + $0x610] sm:$0xff]
    %v322 = vld [vmem:[#allocation5 + $0x618] sm:$0xff]
    %v323 = vld [vmem:[#allocation5 + $0x620] sm:$0xff]
    %v324 = vld [vmem:[#allocation5 + $0x628] sm:$0xff]
    %v325 = vld [vmem:[#allocation5 + $0x630] sm:$0xff]
    %v326 = vld [vmem:[#allocation5 + $0x638] sm:$0xff]
    %v327 = vld [vmem:[#allocation5 + $0x640] sm:$0xff]
    %v328 = vld [vmem:[#allocation5 + $0x648] sm:$0xff]
    %v329 = vld [vmem:[#allocation5 + $0x650] sm:$0xff]
    %v330 = vld [vmem:[#allocation5 + $0x658] sm:$0xff]
    %v331 = vld [vmem:[#allocation5 + $0x660] sm:$0xff]
    %v332 = vld [vmem:[#allocation5 + $0x668] sm:$0xff]
    %v333 = vld [vmem:[#allocation5 + $0x670] sm:$0xff]
    %v334 = vld [vmem:[#allocation5 + $0x678] sm:$0xff]
    %v335 = vld [vmem:[#allocation5 + $0x680] sm:$0xff]
    %v336 = vld [vmem:[#allocation5 + $0x688] sm:$0xff]
    %v337 = vld [vmem:[#allocation5 + $0x690] sm:$0xff]
    %v338 = vld [vmem:[#allocation5 + $0x698] sm:$0xff]
    %v339 = vld [vmem:[#allocation5 + $0x6a0] sm:$0xff]
    %v340 = vld [vmem:[#allocation5 + $0x6a8] sm:$0xff]
    %v341 = vld [vmem:[#allocation5 + $0x6b0] sm:$0xff]
    %v342 = vld [vmem:[#allocation5 + $0x6b8] sm:$0xff]
    %v343 = vld [vmem:[#allocation5 + $0x6c0] sm:$0xff]
    %v344 = vld [vmem:[#allocation5 + $0x6c8] sm:$0xff]
    %v345 = vld [vmem:[#allocation5 + $0x6d0] sm:$0xff]
    %v346 = vld [vmem:[#allocation5 + $0x6d8] sm:$0xff]
    %v347 = vld [vmem:[#allocation5 + $0x6e0] sm:$0xff]
    %v348 = vld [vmem:[#allocation5 + $0x6e8] sm:$0xff]
    %v349 = vld [vmem:[#allocation5 + $0x6f0] sm:$0xff]
    %v350 = vld [vmem:[#allocation5 + $0x6f8] sm:$0xff]
    %v351 = vld [vmem:[#allocation7] sm:$0xf]
    %v353 = vperm.slane %v351, 0
    %v354 = vperm.slane %v351, 1
    %v355 = vperm.slane %v351, 2
    %v356 = vperm.slane %v351, 3
    %v365 = vunpack.c.l.b16 %v123
    %v366 = vunpack.c.h.b16 %v123
    %v367 = vunpack.c.l.b16 %v124
    %v368 = vunpack.c.h.b16 %v124
    %v369 = vunpack.c.l.b16 %v125
    %v370 = vunpack.c.h.b16 %v125
    %v371 = vunpack.c.l.b16 %v126
    %v372 = vpack.c.b16 %v365, %v365
    %v373 = vpack.c.b16 %v366, %v366
    %v374 = vpack.c.b16 %v367, %v367
    %v375 = vpack.c.b16 %v368, %v368
    %v376 = vpack.c.b16 %v369, %v369
    %v377 = vpack.c.b16 %v370, %v370
    %v378 = vpack.c.b16 %v371, %v371
    %v610 = vunpack.c.l.b16 %v127
    %v611 = vunpack.c.h.b16 %v127
    %v612 = vunpack.c.l.b16 %v128
    %v613 = vunpack.c.h.b16 %v128
    %v614 = vunpack.c.l.b16 %v129
    %v615 = vunpack.c.h.b16 %v129
    %v616 = vunpack.c.l.b16 %v130
    %v617 = vunpack.c.h.b16 %v130
    %v618 = vunpack.c.l.b16 %v131
    %v619 = vunpack.c.h.b16 %v131
    %v620 = vunpack.c.l.b16 %v132
    %v621 = vunpack.c.h.b16 %v132
    %v622 = vunpack.c.l.b16 %v133
    %v623 = vunpack.c.h.b16 %v133
    %v624 = vunpack.c.l.b16 %v134
    %v625 = vunpack.c.h.b16 %v134
    %v626 = vunpack.c.l.b16 %v135
    %v627 = vunpack.c.h.b16 %v135
    %v628 = vunpack.c.l.b16 %v136
    %v629 = vunpack.c.h.b16 %v136
    %v630 = vunpack.c.l.b16 %v137
    %v631 = vunpack.c.h.b16 %v137
    %v632 = vunpack.c.l.b16 %v138
    %v633 = vunpack.c.h.b16 %v138
    %v634 = vunpack.c.l.b16 %v139
    %v635 = vunpack.c.h.b16 %v139
    %v636 = vunpack.c.l.b16 %v140
    %v637 = vunpack.c.h.b16 %v140
    %v638 = vunpack.c.l.b16 %v141
    %v639 = vunpack.c.h.b16 %v141
    %v640 = vunpack.c.l.b16 %v142
    %v641 = vunpack.c.h.b16 %v142
    %v642 = vunpack.c.l.b16 %v143
    %v643 = vunpack.c.h.b16 %v143
    %v644 = vunpack.c.l.b16 %v144
    %v645 = vunpack.c.h.b16 %v144
    %v646 = vunpack.c.l.b16 %v145
    %v647 = vunpack.c.h.b16 %v145
    %v648 = vunpack.c.l.b16 %v146
    %v649 = vunpack.c.h.b16 %v146
    %v650 = vunpack.c.l.b16 %v147
    %v651 = vunpack.c.h.b16 %v147
    %v652 = vunpack.c.l.b16 %v148
    %v653 = vunpack.c.h.b16 %v148
    %v654 = vunpack.c.l.b16 %v149
    %v655 = vunpack.c.h.b16 %v149
    %v656 = vunpack.c.l.b16 %v150
    %v657 = vunpack.c.h.b16 %v150
    %v658 = vunpack.c.l.b16 %v151
    %v659 = vunpack.c.h.b16 %v151
    %v660 = vunpack.c.l.b16 %v152
    %v661 = vunpack.c.h.b16 %v152
    %v662 = vunpack.c.l.b16 %v153
    %v663 = vunpack.c.h.b16 %v153
    %v664 = vunpack.c.l.b16 %v154
    %v665 = vunpack.c.h.b16 %v154
    %v666 = vunpack.c.l.b16 %v155
    %v667 = vunpack.c.h.b16 %v155
    %v668 = vunpack.c.l.b16 %v156
    %v669 = vunpack.c.h.b16 %v156
    %v670 = vunpack.c.l.b16 %v157
    %v671 = vunpack.c.h.b16 %v157
    %v672 = vunpack.c.l.b16 %v158
    %v673 = vunpack.c.h.b16 %v158
    %v674 = vunpack.c.l.b16 %v159
    %v675 = vunpack.c.h.b16 %v159
    %v676 = vunpack.c.l.b16 %v160
    %v677 = vunpack.c.h.b16 %v160
    %v678 = vunpack.c.l.b16 %v161
    %v679 = vunpack.c.h.b16 %v161
    %v680 = vunpack.c.l.b16 %v162
    %v681 = vunpack.c.h.b16 %v162
    %v682 = vunpack.c.l.b16 %v163
    %v683 = vunpack.c.h.b16 %v163
    %v684 = vunpack.c.l.b16 %v164
    %v685 = vunpack.c.h.b16 %v164
    %v686 = vunpack.c.l.b16 %v165
    %v687 = vunpack.c.h.b16 %v165
    %v688 = vunpack.c.l.b16 %v166
    %v689 = vunpack.c.h.b16 %v166
    %v690 = vunpack.c.l.b16 %v167
    %v691 = vunpack.c.h.b16 %v167
    %v692 = vunpack.c.l.b16 %v168
    %v693 = vunpack.c.h.b16 %v168
    %v694 = vunpack.c.l.b16 %v169
    %v695 = vunpack.c.h.b16 %v169
    %v696 = vunpack.c.l.b16 %v170
    %v697 = vunpack.c.h.b16 %v170
    %v698 = vunpack.c.l.b16 %v171
    %v699 = vunpack.c.h.b16 %v171
    %v700 = vunpack.c.l.b16 %v172
    %v701 = vunpack.c.h.b16 %v172
    %v702 = vunpack.c.l.b16 %v173
    %v703 = vunpack.c.h.b16 %v173
    %v704 = vunpack.c.l.b16 %v174
    %v705 = vunpack.c.h.b16 %v174
    %v706 = vunpack.c.l.b16 %v175
    %v707 = vunpack.c.h.b16 %v175
    %v708 = vunpack.c.l.b16 %v176
    %v709 = vunpack.c.h.b16 %v176
    %v710 = vunpack.c.l.b16 %v177
    %v711 = vunpack.c.h.b16 %v177
    %v712 = vunpack.c.l.b16 %v178
    %v713 = vunpack.c.h.b16 %v178
    %v714 = vunpack.c.l.b16 %v179
    %v715 = vunpack.c.h.b16 %v179
    %v716 = vunpack.c.l.b16 %v180
    %v717 = vunpack.c.h.b16 %v180
    %v718 = vunpack.c.l.b16 %v181
    %v719 = vunpack.c.h.b16 %v181
    %v720 = vunpack.c.l.b16 %v182
    %v721 = vunpack.c.h.b16 %v182
    %v722 = vunpack.c.l.b16 %v183
    %v723 = vunpack.c.h.b16 %v183
    %v724 = vunpack.c.l.b16 %v184
    %v725 = vunpack.c.h.b16 %v184
    %v726 = vunpack.c.l.b16 %v185
    %v727 = vunpack.c.h.b16 %v185
    %v728 = vunpack.c.l.b16 %v186
    %v729 = vunpack.c.h.b16 %v186
    %v730 = vunpack.c.l.b16 %v187
    %v731 = vunpack.c.h.b16 %v187
    %v732 = vunpack.c.l.b16 %v188
    %v733 = vunpack.c.h.b16 %v188
    %v734 = vunpack.c.l.b16 %v189
    %v735 = vunpack.c.h.b16 %v189
    %v736 = vunpack.c.l.b16 %v190
    %v737 = vunpack.c.h.b16 %v190
    %v738 = vunpack.c.l.b16 %v191
    %v739 = vunpack.c.h.b16 %v191
    %v740 = vunpack.c.l.b16 %v192
    %v741 = vunpack.c.h.b16 %v192
    %v742 = vunpack.c.l.b16 %v193
    %v743 = vunpack.c.h.b16 %v193
    %v744 = vunpack.c.l.b16 %v194
    %v745 = vunpack.c.h.b16 %v194
    %v746 = vunpack.c.l.b16 %v195
    %v747 = vunpack.c.h.b16 %v195
    %v748 = vunpack.c.l.b16 %v196
    %v749 = vunpack.c.h.b16 %v196
    %v750 = vunpack.c.l.b16 %v197
    %v751 = vunpack.c.h.b16 %v197
    %v752 = vunpack.c.l.b16 %v198
    %v753 = vunpack.c.h.b16 %v198
    %v754 = vunpack.c.l.b16 %v199
    %v755 = vunpack.c.h.b16 %v199
    %v756 = vunpack.c.l.b16 %v200
    %v757 = vunpack.c.h.b16 %v200
    %v758 = vunpack.c.l.b16 %v201
    %v759 = vunpack.c.h.b16 %v201
    %v760 = vunpack.c.l.b16 %v202
    %v761 = vunpack.c.h.b16 %v202
    %v762 = vunpack.c.l.b16 %v203
    %v763 = vunpack.c.h.b16 %v203
    %v764 = vunpack.c.l.b16 %v204
    %v765 = vunpack.c.h.b16 %v204
    %v766 = vunpack.c.l.b16 %v205
    %v767 = vunpack.c.h.b16 %v205
    %v768 = vunpack.c.l.b16 %v206
    %v769 = vunpack.c.h.b16 %v206
    %v770 = vunpack.c.l.b16 %v207
    %v771 = vunpack.c.h.b16 %v207
    %v772 = vunpack.c.l.b16 %v208
    %v773 = vunpack.c.h.b16 %v208
    %v774 = vunpack.c.l.b16 %v209
    %v775 = vunpack.c.h.b16 %v209
    %v776 = vunpack.c.l.b16 %v210
    %v777 = vunpack.c.h.b16 %v210
    %v778 = vunpack.c.l.b16 %v211
    %v779 = vunpack.c.h.b16 %v211
    %v780 = vunpack.c.l.b16 %v212
    %v781 = vunpack.c.h.b16 %v212
    %v782 = vunpack.c.l.b16 %v213
    %v783 = vunpack.c.h.b16 %v213
    %v784 = vunpack.c.l.b16 %v214
    %v785 = vunpack.c.h.b16 %v214
    %v786 = vunpack.c.l.b16 %v215
    %v787 = vunpack.c.h.b16 %v215
    %v788 = vunpack.c.l.b16 %v216
    %v789 = vunpack.c.h.b16 %v216
    %v790 = vunpack.c.l.b16 %v217
    %v791 = vunpack.c.h.b16 %v217
    %v792 = vunpack.c.l.b16 %v218
    %v793 = vunpack.c.h.b16 %v218
    %v794 = vunpack.c.l.b16 %v219
    %v795 = vunpack.c.h.b16 %v219
    %v796 = vunpack.c.l.b16 %v220
    %v797 = vunpack.c.h.b16 %v220
    %v798 = vunpack.c.l.b16 %v221
    %v799 = vunpack.c.h.b16 %v221
    %v800 = vunpack.c.l.b16 %v222
    %v801 = vunpack.c.h.b16 %v222
    %v802 = vunpack.c.l.b16 %v223
    %v803 = vunpack.c.h.b16 %v223
    %v804 = vunpack.c.l.b16 %v224
    %v805 = vunpack.c.h.b16 %v224
    %v806 = vunpack.c.l.b16 %v225
    %v807 = vunpack.c.h.b16 %v225
    %v808 = vunpack.c.l.b16 %v226
    %v809 = vunpack.c.h.b16 %v226
    %v810 = vunpack.c.l.b16 %v227
    %v811 = vunpack.c.h.b16 %v227
    %v812 = vunpack.c.l.b16 %v228
    %v813 = vunpack.c.h.b16 %v228
    %v814 = vunpack.c.l.b16 %v229
    %v815 = vunpack.c.h.b16 %v229
    %v816 = vunpack.c.l.b16 %v230
    %v817 = vunpack.c.h.b16 %v230
    %v818 = vunpack.c.l.b16 %v231
    %v819 = vunpack.c.h.b16 %v231
    %v820 = vunpack.c.l.b16 %v232
    %v821 = vunpack.c.h.b16 %v232
    %v822 = vunpack.c.l.b16 %v233
    %v823 = vunpack.c.h.b16 %v233
    %v824 = vunpack.c.l.b16 %v234
    %v825 = vunpack.c.h.b16 %v234
    %v826 = vunpack.c.l.b16 %v235
    %v827 = vunpack.c.h.b16 %v235
    %v828 = vunpack.c.l.b16 %v236
    %v829 = vunpack.c.h.b16 %v236
    %v830 = vunpack.c.l.b16 %v237
    %v831 = vunpack.c.h.b16 %v237
    %v832 = vunpack.c.l.b16 %v238
    %v833 = vunpack.c.h.b16 %v238
    %v834 = vunpack.c.l.b16 %v239
    %v835 = vunpack.c.h.b16 %v239
    %v836 = vunpack.c.l.b16 %v240
    %v837 = vunpack.c.h.b16 %v240
    %v838 = vunpack.c.l.b16 %v241
    %v839 = vunpack.c.h.b16 %v241
    %v840 = vunpack.c.l.b16 %v242
    %v841 = vunpack.c.h.b16 %v242
    %v842 = vunpack.c.l.b16 %v243
    %v843 = vunpack.c.h.b16 %v243
    %v844 = vunpack.c.l.b16 %v244
    %v845 = vunpack.c.h.b16 %v244
    %v846 = vunpack.c.l.b16 %v245
    %v847 = vunpack.c.h.b16 %v245
    %v848 = vunpack.c.l.b16 %v246
    %v849 = vunpack.c.h.b16 %v246
    %v850 = vunpack.c.l.b16 %v247
    %v851 = vunpack.c.h.b16 %v247
    %v852 = vunpack.c.l.b16 %v248
    %v853 = vunpack.c.h.b16 %v248
    %v854 = vunpack.c.l.b16 %v249
    %v855 = vunpack.c.h.b16 %v249
    %v856 = vunpack.c.l.b16 %v250
    %v857 = vunpack.c.h.b16 %v250
    %v858 = vunpack.c.l.b16 %v251
    %v859 = vunpack.c.h.b16 %v251
    %v860 = vunpack.c.l.b16 %v252
    %v861 = vunpack.c.h.b16 %v252
    %v862 = vunpack.c.l.b16 %v253
    %v863 = vunpack.c.h.b16 %v253
    %v864 = vunpack.c.l.b16 %v254
    %v865 = vunpack.c.h.b16 %v254
    %v866 = vunpack.c.l.b16 %v255
    %v867 = vunpack.c.h.b16 %v255
    %v868 = vunpack.c.l.b16 %v256
    %v869 = vunpack.c.h.b16 %v256
    %v870 = vunpack.c.l.b16 %v257
    %v871 = vunpack.c.h.b16 %v257
    %v872 = vunpack.c.l.b16 %v258
    %v873 = vunpack.c.h.b16 %v258
    %v874 = vunpack.c.l.b16 %v259
    %v875 = vunpack.c.h.b16 %v259
    %v876 = vunpack.c.l.b16 %v260
    %v877 = vunpack.c.h.b16 %v260
    %v878 = vunpack.c.l.b16 %v261
    %v879 = vunpack.c.h.b16 %v261
    %v880 = vunpack.c.l.b16 %v262
    %v881 = vunpack.c.h.b16 %v262
    %v882 = vunpack.c.l.b16 %v263
    %v883 = vunpack.c.h.b16 %v263
    %v884 = vunpack.c.l.b16 %v264
    %v885 = vunpack.c.h.b16 %v264
    %v886 = vunpack.c.l.b16 %v265
    %v887 = vunpack.c.h.b16 %v265
    %v888 = vunpack.c.l.b16 %v266
    %v889 = vunpack.c.h.b16 %v266
    %v890 = vunpack.c.l.b16 %v267
    %v891 = vunpack.c.h.b16 %v267
    %v892 = vunpack.c.l.b16 %v268
    %v893 = vunpack.c.h.b16 %v268
    %v894 = vunpack.c.l.b16 %v269
    %v895 = vunpack.c.h.b16 %v269
    %v896 = vunpack.c.l.b16 %v270
    %v897 = vunpack.c.h.b16 %v270
    %v898 = vunpack.c.l.b16 %v271
    %v899 = vunpack.c.h.b16 %v271
    %v900 = vunpack.c.l.b16 %v272
    %v901 = vunpack.c.h.b16 %v272
    %v902 = vunpack.c.l.b16 %v273
    %v903 = vunpack.c.h.b16 %v273
    %v904 = vunpack.c.l.b16 %v274
    %v905 = vunpack.c.h.b16 %v274
    %v906 = vunpack.c.l.b16 %v275
    %v907 = vunpack.c.h.b16 %v275
    %v908 = vunpack.c.l.b16 %v276
    %v909 = vunpack.c.h.b16 %v276
    %v910 = vunpack.c.l.b16 %v277
    %v911 = vunpack.c.h.b16 %v277
    %v912 = vunpack.c.l.b16 %v278
    %v913 = vunpack.c.h.b16 %v278
    %v914 = vunpack.c.l.b16 %v279
    %v915 = vunpack.c.h.b16 %v279
    %v916 = vunpack.c.l.b16 %v280
    %v917 = vunpack.c.h.b16 %v280
    %v918 = vunpack.c.l.b16 %v281
    %v919 = vunpack.c.h.b16 %v281
    %v920 = vunpack.c.l.b16 %v282
    %v921 = vunpack.c.h.b16 %v282
    %v922 = vunpack.c.l.b16 %v283
    %v923 = vunpack.c.h.b16 %v283
    %v924 = vunpack.c.l.b16 %v284
    %v925 = vunpack.c.h.b16 %v284
    %v926 = vunpack.c.l.b16 %v285
    %v927 = vunpack.c.h.b16 %v285
    %v928 = vunpack.c.l.b16 %v286
    %v929 = vunpack.c.h.b16 %v286
    %v930 = vunpack.c.l.b16 %v287
    %v931 = vunpack.c.h.b16 %v287
    %v932 = vunpack.c.l.b16 %v288
    %v933 = vunpack.c.h.b16 %v288
    %v934 = vunpack.c.l.b16 %v289
    %v935 = vunpack.c.h.b16 %v289
    %v936 = vunpack.c.l.b16 %v290
    %v937 = vunpack.c.h.b16 %v290
    %v938 = vunpack.c.l.b16 %v291
    %v939 = vunpack.c.h.b16 %v291
    %v940 = vunpack.c.l.b16 %v292
    %v941 = vunpack.c.h.b16 %v292
    %v942 = vunpack.c.l.b16 %v293
    %v943 = vunpack.c.h.b16 %v293
    %v944 = vunpack.c.l.b16 %v294
    %v945 = vunpack.c.h.b16 %v294
    %v946 = vunpack.c.l.b16 %v295
    %v947 = vunpack.c.h.b16 %v295
    %v948 = vunpack.c.l.b16 %v296
    %v949 = vunpack.c.h.b16 %v296
    %v950 = vunpack.c.l.b16 %v297
    %v951 = vunpack.c.h.b16 %v297
    %v952 = vunpack.c.l.b16 %v298
    %v953 = vunpack.c.h.b16 %v298
    %v954 = vunpack.c.l.b16 %v299
    %v955 = vunpack.c.h.b16 %v299
    %v956 = vunpack.c.l.b16 %v300
    %v957 = vunpack.c.h.b16 %v300
    %v958 = vunpack.c.l.b16 %v301
    %v959 = vunpack.c.h.b16 %v301
    %v960 = vunpack.c.l.b16 %v302
    %v961 = vunpack.c.h.b16 %v302
    %v962 = vunpack.c.l.b16 %v303
    %v963 = vunpack.c.h.b16 %v303
    %v964 = vunpack.c.l.b16 %v304
    %v965 = vunpack.c.h.b16 %v304
    %v966 = vunpack.c.l.b16 %v305
    %v967 = vunpack.c.h.b16 %v305
    %v968 = vunpack.c.l.b16 %v306
    %v969 = vunpack.c.h.b16 %v306
    %v970 = vunpack.c.l.b16 %v307
    %v971 = vunpack.c.h.b16 %v307
    %v972 = vunpack.c.l.b16 %v308
    %v973 = vunpack.c.h.b16 %v308
    %v974 = vunpack.c.l.b16 %v309
    %v975 = vunpack.c.h.b16 %v309
    %v976 = vunpack.c.l.b16 %v310
    %v977 = vunpack.c.h.b16 %v310
    %v978 = vunpack.c.l.b16 %v311
    %v979 = vunpack.c.h.b16 %v311
    %v980 = vunpack.c.l.b16 %v312
    %v981 = vunpack.c.h.b16 %v312
    %v982 = vunpack.c.l.b16 %v313
    %v983 = vunpack.c.h.b16 %v313
    %v984 = vunpack.c.l.b16 %v314
    %v985 = vunpack.c.h.b16 %v314
    %v986 = vunpack.c.l.b16 %v315
    %v987 = vunpack.c.h.b16 %v315
    %v988 = vunpack.c.l.b16 %v316
    %v989 = vunpack.c.h.b16 %v316
    %v990 = vunpack.c.l.b16 %v317
    %v991 = vunpack.c.h.b16 %v317
    %v992 = vunpack.c.l.b16 %v318
    %v993 = vunpack.c.h.b16 %v318
    %v994 = vunpack.c.l.b16 %v319
    %v995 = vunpack.c.h.b16 %v319
    %v996 = vunpack.c.l.b16 %v320
    %v997 = vunpack.c.h.b16 %v320
    %v998 = vunpack.c.l.b16 %v321
    %v999 = vunpack.c.h.b16 %v321
    %v1000 = vunpack.c.l.b16 %v322
    %v1001 = vunpack.c.h.b16 %v322
    %v1002 = vunpack.c.l.b16 %v323
    %v1003 = vunpack.c.h.b16 %v323
    %v1004 = vunpack.c.l.b16 %v324
    %v1005 = vunpack.c.h.b16 %v324
    %v1006 = vunpack.c.l.b16 %v325
    %v1007 = vunpack.c.h.b16 %v325
    %v1008 = vunpack.c.l.b16 %v326
    %v1009 = vunpack.c.h.b16 %v326
    %v1010 = vunpack.c.l.b16 %v327
    %v1011 = vunpack.c.h.b16 %v327
    %v1012 = vunpack.c.l.b16 %v328
    %v1013 = vunpack.c.h.b16 %v328
    %v1014 = vunpack.c.l.b16 %v329
    %v1015 = vunpack.c.h.b16 %v329
    %v1016 = vunpack.c.l.b16 %v330
    %v1017 = vunpack.c.h.b16 %v330
    %v1018 = vunpack.c.l.b16 %v331
    %v1019 = vunpack.c.h.b16 %v331
    %v1020 = vunpack.c.l.b16 %v332
    %v1021 = vunpack.c.h.b16 %v332
    %v1022 = vunpack.c.l.b16 %v333
    %v1023 = vunpack.c.h.b16 %v333
    %v1024 = vunpack.c.l.b16 %v334
    %v1025 = vunpack.c.h.b16 %v334
    %v1026 = vunpack.c.l.b16 %v335
    %v1027 = vunpack.c.h.b16 %v335
    %v1028 = vunpack.c.l.b16 %v336
    %v1029 = vunpack.c.h.b16 %v336
    %v1030 = vunpack.c.l.b16 %v337
    %v1031 = vunpack.c.h.b16 %v337
    %v1032 = vunpack.c.l.b16 %v338
    %v1033 = vunpack.c.h.b16 %v338
    %v1034 = vunpack.c.l.b16 %v339
    %v1035 = vunpack.c.h.b16 %v339
    %v1036 = vunpack.c.l.b16 %v340
    %v1037 = vunpack.c.h.b16 %v340
    %v1038 = vunpack.c.l.b16 %v341
    %v1039 = vunpack.c.h.b16 %v341
    %v1040 = vunpack.c.l.b16 %v342
    %v1041 = vunpack.c.h.b16 %v342
    %v1042 = vunpack.c.l.b16 %v343
    %v1043 = vunpack.c.h.b16 %v343
    %v1044 = vunpack.c.l.b16 %v344
    %v1045 = vunpack.c.h.b16 %v344
    %v1046 = vunpack.c.l.b16 %v345
    %v1047 = vunpack.c.h.b16 %v345
    %v1048 = vunpack.c.l.b16 %v346
    %v1049 = vunpack.c.h.b16 %v346
    %v1050 = vunpack.c.l.b16 %v347
    %v1051 = vunpack.c.h.b16 %v347
    %v1052 = vunpack.c.l.b16 %v348
    %v1053 = vunpack.c.h.b16 %v348
    %v1054 = vunpack.c.l.b16 %v349
    %v1055 = vunpack.c.h.b16 %v349
    %v1056 = vunpack.c.l.b16 %v350
    %v1057 = vunpack.c.h.b16 %v350
    %v1058 = vpack.c.b16 %v614, %v610
    %v1059 = vpack.c.b16 %v615, %v611
    %v1060 = vpack.c.b16 %v616, %v612
    %v1061 = vpack.c.b16 %v617, %v613
    %v1062 = vpack.c.b16 %v622, %v618
    %v1063 = vpack.c.b16 %v623, %v619
    %v1064 = vpack.c.b16 %v624, %v620
    %v1065 = vpack.c.b16 %v625, %v621
    %v1066 = vpack.c.b16 %v630, %v626
    %v1067 = vpack.c.b16 %v631, %v627
    %v1068 = vpack.c.b16 %v632, %v628
    %v1069 = vpack.c.b16 %v633, %v629
    %v1070 = vpack.c.b16 %v638, %v634
    %v1071 = vpack.c.b16 %v639, %v635
    %v1072 = vpack.c.b16 %v640, %v636
    %v1073 = vpack.c.b16 %v641, %v637
    %v1074 = vpack.c.b16 %v646, %v642
    %v1075 = vpack.c.b16 %v647, %v643
    %v1076 = vpack.c.b16 %v648, %v644
    %v1077 = vpack.c.b16 %v649, %v645
    %v1078 = vpack.c.b16 %v654, %v650
    %v1079 = vpack.c.b16 %v655, %v651
    %v1080 = vpack.c.b16 %v656, %v652
    %v1081 = vpack.c.b16 %v657, %v653
    %v1082 = vpack.c.b16 %v662, %v658
    %v1083 = vpack.c.b16 %v663, %v659
    %v1084 = vpack.c.b16 %v664, %v660
    %v1085 = vpack.c.b16 %v665, %v661
    %v1086 = vpack.c.b16 %v670, %v666
    %v1087 = vpack.c.b16 %v671, %v667
    %v1088 = vpack.c.b16 %v672, %v668
    %v1089 = vpack.c.b16 %v673, %v669
    %v1090 = vpack.c.b16 %v678, %v674
    %v1091 = vpack.c.b16 %v679, %v675
    %v1092 = vpack.c.b16 %v680, %v676
    %v1093 = vpack.c.b16 %v681, %v677
    %v1094 = vpack.c.b16 %v686, %v682
    %v1095 = vpack.c.b16 %v687, %v683
    %v1096 = vpack.c.b16 %v688, %v684
    %v1097 = vpack.c.b16 %v689, %v685
    %v1098 = vpack.c.b16 %v694, %v690
    %v1099 = vpack.c.b16 %v695, %v691
    %v1100 = vpack.c.b16 %v696, %v692
    %v1101 = vpack.c.b16 %v697, %v693
    %v1102 = vpack.c.b16 %v702, %v698
    %v1103 = vpack.c.b16 %v703, %v699
    %v1104 = vpack.c.b16 %v704, %v700
    %v1105 = vpack.c.b16 %v705, %v701
    %v1106 = vpack.c.b16 %v710, %v706
    %v1107 = vpack.c.b16 %v711, %v707
    %v1108 = vpack.c.b16 %v712, %v708
    %v1109 = vpack.c.b16 %v713, %v709
    %v1110 = vpack.c.b16 %v718, %v714
    %v1111 = vpack.c.b16 %v719, %v715
    %v1112 = vpack.c.b16 %v720, %v716
    %v1113 = vpack.c.b16 %v721, %v717
    %v1114 = vpack.c.b16 %v726, %v722
    %v1115 = vpack.c.b16 %v727, %v723
    %v1116 = vpack.c.b16 %v728, %v724
    %v1117 = vpack.c.b16 %v729, %v725
    %v1118 = vpack.c.b16 %v734, %v730
    %v1119 = vpack.c.b16 %v735, %v731
    %v1120 = vpack.c.b16 %v736, %v732
    %v1121 = vpack.c.b16 %v737, %v733
    %v1122 = vpack.c.b16 %v742, %v738
    %v1123 = vpack.c.b16 %v743, %v739
    %v1124 = vpack.c.b16 %v744, %v740
    %v1125 = vpack.c.b16 %v745, %v741
    %v1126 = vpack.c.b16 %v750, %v746
    %v1127 = vpack.c.b16 %v751, %v747
    %v1128 = vpack.c.b16 %v752, %v748
    %v1129 = vpack.c.b16 %v753, %v749
    %v1130 = vpack.c.b16 %v758, %v754
    %v1131 = vpack.c.b16 %v759, %v755
    %v1132 = vpack.c.b16 %v760, %v756
    %v1133 = vpack.c.b16 %v761, %v757
    %v1134 = vpack.c.b16 %v766, %v762
    %v1135 = vpack.c.b16 %v767, %v763
    %v1136 = vpack.c.b16 %v768, %v764
    %v1137 = vpack.c.b16 %v769, %v765
    %v1138 = vpack.c.b16 %v774, %v770
    %v1139 = vpack.c.b16 %v775, %v771
    %v1140 = vpack.c.b16 %v776, %v772
    %v1141 = vpack.c.b16 %v777, %v773
    %v1142 = vpack.c.b16 %v782, %v778
    %v1143 = vpack.c.b16 %v783, %v779
    %v1144 = vpack.c.b16 %v784, %v780
    %v1145 = vpack.c.b16 %v785, %v781
    %v1146 = vpack.c.b16 %v790, %v786
    %v1147 = vpack.c.b16 %v791, %v787
    %v1148 = vpack.c.b16 %v792, %v788
    %v1149 = vpack.c.b16 %v793, %v789
    %v1150 = vpack.c.b16 %v798, %v794
    %v1151 = vpack.c.b16 %v799, %v795
    %v1152 = vpack.c.b16 %v800, %v796
    %v1153 = vpack.c.b16 %v801, %v797
    %v1154 = vpack.c.b16 %v806, %v802
    %v1155 = vpack.c.b16 %v807, %v803
    %v1156 = vpack.c.b16 %v808, %v804
    %v1157 = vpack.c.b16 %v809, %v805
    %v1158 = vpack.c.b16 %v814, %v810
    %v1159 = vpack.c.b16 %v815, %v811
    %v1160 = vpack.c.b16 %v816, %v812
    %v1161 = vpack.c.b16 %v817, %v813
    %v1162 = vpack.c.b16 %v822, %v818
    %v1163 = vpack.c.b16 %v823, %v819
    %v1164 = vpack.c.b16 %v824, %v820
    %v1165 = vpack.c.b16 %v825, %v821
    %v1166 = vpack.c.b16 %v830, %v826
    %v1167 = vpack.c.b16 %v831, %v827
    %v1168 = vpack.c.b16 %v832, %v828
    %v1169 = vpack.c.b16 %v833, %v829
    %v1170 = vpack.c.b16 %v838, %v834
    %v1171 = vpack.c.b16 %v839, %v835
    %v1172 = vpack.c.b16 %v840, %v836
    %v1173 = vpack.c.b16 %v841, %v837
    %v1174 = vpack.c.b16 %v846, %v842
    %v1175 = vpack.c.b16 %v847, %v843
    %v1176 = vpack.c.b16 %v848, %v844
    %v1177 = vpack.c.b16 %v849, %v845
    %v1178 = vpack.c.b16 %v854, %v850
    %v1179 = vpack.c.b16 %v855, %v851
    %v1180 = vpack.c.b16 %v856, %v852
    %v1181 = vpack.c.b16 %v857, %v853
    %v1182 = vpack.c.b16 %v862, %v858
    %v1183 = vpack.c.b16 %v863, %v859
    %v1184 = vpack.c.b16 %v864, %v860
    %v1185 = vpack.c.b16 %v865, %v861
    %v1186 = vpack.c.b16 %v870, %v866
    %v1187 = vpack.c.b16 %v871, %v867
    %v1188 = vpack.c.b16 %v872, %v868
    %v1189 = vpack.c.b16 %v873, %v869
    %v1190 = vpack.c.b16 %v878, %v874
    %v1191 = vpack.c.b16 %v879, %v875
    %v1192 = vpack.c.b16 %v880, %v876
    %v1193 = vpack.c.b16 %v881, %v877
    %v1194 = vpack.c.b16 %v886, %v882
    %v1195 = vpack.c.b16 %v887, %v883
    %v1196 = vpack.c.b16 %v888, %v884
    %v1197 = vpack.c.b16 %v889, %v885
    %v1198 = vpack.c.b16 %v894, %v890
    %v1199 = vpack.c.b16 %v895, %v891
    %v1200 = vpack.c.b16 %v896, %v892
    %v1201 = vpack.c.b16 %v897, %v893
    %v1202 = vpack.c.b16 %v902, %v898
    %v1203 = vpack.c.b16 %v903, %v899
    %v1204 = vpack.c.b16 %v904, %v900
    %v1205 = vpack.c.b16 %v905, %v901
    %v1206 = vpack.c.b16 %v910, %v906
    %v1207 = vpack.c.b16 %v911, %v907
    %v1208 = vpack.c.b16 %v912, %v908
    %v1209 = vpack.c.b16 %v913, %v909
    %v1210 = vpack.c.b16 %v918, %v914
    %v1211 = vpack.c.b16 %v919, %v915
    %v1212 = vpack.c.b16 %v920, %v916
    %v1213 = vpack.c.b16 %v921, %v917
    %v1214 = vpack.c.b16 %v926, %v922
    %v1215 = vpack.c.b16 %v927, %v923
    %v1216 = vpack.c.b16 %v928, %v924
    %v1217 = vpack.c.b16 %v929, %v925
    %v1218 = vpack.c.b16 %v934, %v930
    %v1219 = vpack.c.b16 %v935, %v931
    %v1220 = vpack.c.b16 %v936, %v932
    %v1221 = vpack.c.b16 %v937, %v933
    %v1222 = vpack.c.b16 %v942, %v938
    %v1223 = vpack.c.b16 %v943, %v939
    %v1224 = vpack.c.b16 %v944, %v940
    %v1225 = vpack.c.b16 %v945, %v941
    %v1226 = vpack.c.b16 %v950, %v946
    %v1227 = vpack.c.b16 %v951, %v947
    %v1228 = vpack.c.b16 %v952, %v948
    %v1229 = vpack.c.b16 %v953, %v949
    %v1230 = vpack.c.b16 %v958, %v954
    %v1231 = vpack.c.b16 %v959, %v955
    %v1232 = vpack.c.b16 %v960, %v956
    %v1233 = vpack.c.b16 %v961, %v957
    %v1234 = vpack.c.b16 %v966, %v962
    %v1235 = vpack.c.b16 %v967, %v963
    %v1236 = vpack.c.b16 %v968, %v964
    %v1237 = vpack.c.b16 %v969, %v965
    %v1238 = vpack.c.b16 %v974, %v970
    %v1239 = vpack.c.b16 %v975, %v971
    %v1240 = vpack.c.b16 %v976, %v972
    %v1241 = vpack.c.b16 %v977, %v973
    %v1242 = vpack.c.b16 %v982, %v978
    %v1243 = vpack.c.b16 %v983, %v979
    %v1244 = vpack.c.b16 %v984, %v980
    %v1245 = vpack.c.b16 %v985, %v981
    %v1246 = vpack.c.b16 %v990, %v986
    %v1247 = vpack.c.b16 %v991, %v987
    %v1248 = vpack.c.b16 %v992, %v988
    %v1249 = vpack.c.b16 %v993, %v989
    %v1250 = vpack.c.b16 %v998, %v994
    %v1251 = vpack.c.b16 %v999, %v995
    %v1252 = vpack.c.b16 %v1000, %v996
    %v1253 = vpack.c.b16 %v1001, %v997
    %v1254 = vpack.c.b16 %v1006, %v1002
    %v1255 = vpack.c.b16 %v1007, %v1003
    %v1256 = vpack.c.b16 %v1008, %v1004
    %v1257 = vpack.c.b16 %v1009, %v1005
    %v1258 = vpack.c.b16 %v1014, %v1010
    %v1259 = vpack.c.b16 %v1015, %v1011
    %v1260 = vpack.c.b16 %v1016, %v1012
    %v1261 = vpack.c.b16 %v1017, %v1013
    %v1262 = vpack.c.b16 %v1022, %v1018
    %v1263 = vpack.c.b16 %v1023, %v1019
    %v1264 = vpack.c.b16 %v1024, %v1020
    %v1265 = vpack.c.b16 %v1025, %v1021
    %v1266 = vpack.c.b16 %v1030, %v1026
    %v1267 = vpack.c.b16 %v1031, %v1027
    %v1268 = vpack.c.b16 %v1032, %v1028
    %v1269 = vpack.c.b16 %v1033, %v1029
    %v1270 = vpack.c.b16 %v1038, %v1034
    %v1271 = vpack.c.b16 %v1039, %v1035
    %v1272 = vpack.c.b16 %v1040, %v1036
    %v1273 = vpack.c.b16 %v1041, %v1037
    %v1274 = vpack.c.b16 %v1046, %v1042
    %v1275 = vpack.c.b16 %v1047, %v1043
    %v1276 = vpack.c.b16 %v1048, %v1044
    %v1277 = vpack.c.b16 %v1049, %v1045
    %v1278 = vpack.c.b16 %v1054, %v1050
    %v1279 = vpack.c.b16 %v1055, %v1051
    %v1280 = vpack.c.b16 %v1056, %v1052
    %v1281 = vpack.c.b16 %v1057, %v1053
    %1506 = vmatpush.bf16.msra.mxu0 %v1086
    %1507 = vmatpush.bf16.msra.mxu0 %v1082
    %1508 = vmatpush.bf16.msra.mxu0 %v1078
    %1509 = vmatpush.bf16.msra.mxu0 %v1074
    %1510 = vmatpush.bf16.msra.mxu0 %v1070
    %1511 = vmatpush.bf16.msra.mxu0 %v1066
    %1512 = vmatpush.bf16.msra.mxu0 %v1062
    %1513 = vmatpush.bf16.msra.mxu0 %v1058
    %1514 = vmatmul.bf16.gmra.mxu0 %v372
    %v1515 = vpop.f32.mrf.mxu0
    %v1516 = vadd.f32 %v353, %v1515
    %v1517 = vpop.f32.mrf.mxu0
    %1518 = vdwg.mxu0
    %1519 = vmatpush.bf16.msra.mxu0 %v1118
    %1520 = vmatpush.bf16.msra.mxu0 %v1114
    %1521 = vmatpush.bf16.msra.mxu0 %v1110
    %1522 = vmatpush.bf16.msra.mxu0 %v1106
    %1523 = vmatpush.bf16.msra.mxu0 %v1102
    %1524 = vmatpush.bf16.msra.mxu0 %v1098
    %1525 = vmatpush.bf16.msra.mxu0 %v1094
    %1526 = vmatpush.bf16.msra.mxu0 %v1090
    %1527 = vmatmul.bf16.gmra.mxu0 %v373
    %v1528 = vpop.f32.mrf.mxu0
    %v1529 = vadd.f32 %v1516, %v1528
    %v1530 = vpop.f32.mrf.mxu0
    %1531 = vdwg.mxu0
    %1532 = vmatpush.bf16.msra.mxu0 %v1150
    %1533 = vmatpush.bf16.msra.mxu0 %v1146
    %1534 = vmatpush.bf16.msra.mxu0 %v1142
    %1535 = vmatpush.bf16.msra.mxu0 %v1138
    %1536 = vmatpush.bf16.msra.mxu0 %v1134
    %1537 = vmatpush.bf16.msra.mxu0 %v1130
    %1538 = vmatpush.bf16.msra.mxu0 %v1126
    %1539 = vmatpush.bf16.msra.mxu0 %v1122
    %1540 = vmatmul.bf16.gmra.mxu0 %v374
    %v1541 = vpop.f32.mrf.mxu0
    %v1542 = vadd.f32 %v1529, %v1541
    %v1543 = vpop.f32.mrf.mxu0
    %1544 = vdwg.mxu0
    %1545 = vmatpush.bf16.msra.mxu0 %v1182
    %1546 = vmatpush.bf16.msra.mxu0 %v1178
    %1547 = vmatpush.bf16.msra.mxu0 %v1174
    %1548 = vmatpush.bf16.msra.mxu0 %v1170
    %1549 = vmatpush.bf16.msra.mxu0 %v1166
    %1550 = vmatpush.bf16.msra.mxu0 %v1162
    %1551 = vmatpush.bf16.msra.mxu0 %v1158
    %1552 = vmatpush.bf16.msra.mxu0 %v1154
    %1553 = vmatmul.bf16.gmra.mxu0 %v375
    %v1554 = vpop.f32.mrf.mxu0
    %v1555 = vadd.f32 %v1542, %v1554
    %v1556 = vpop.f32.mrf.mxu0
    %1557 = vdwg.mxu0
    %1558 = vmatpush.bf16.msra.mxu0 %v1214
    %1559 = vmatpush.bf16.msra.mxu0 %v1210
    %1560 = vmatpush.bf16.msra.mxu0 %v1206
    %1561 = vmatpush.bf16.msra.mxu0 %v1202
    %1562 = vmatpush.bf16.msra.mxu0 %v1198
    %1563 = vmatpush.bf16.msra.mxu0 %v1194
    %1564 = vmatpush.bf16.msra.mxu0 %v1190
    %1565 = vmatpush.bf16.msra.mxu0 %v1186
    %1566 = vmatmul.bf16.gmra.mxu0 %v376
    %v1567 = vpop.f32.mrf.mxu0
    %v1568 = vadd.f32 %v1555, %v1567
    %v1569 = vpop.f32.mrf.mxu0
    %1570 = vdwg.mxu0
    %1571 = vmatpush.bf16.msra.mxu0 %v1246
    %1572 = vmatpush.bf16.msra.mxu0 %v1242
    %1573 = vmatpush.bf16.msra.mxu0 %v1238
    %1574 = vmatpush.bf16.msra.mxu0 %v1234
    %1575 = vmatpush.bf16.msra.mxu0 %v1230
    %1576 = vmatpush.bf16.msra.mxu0 %v1226
    %1577 = vmatpush.bf16.msra.mxu0 %v1222
    %1578 = vmatpush.bf16.msra.mxu0 %v1218
    %1579 = vmatmul.bf16.gmra.mxu0 %v377
    %v1580 = vpop.f32.mrf.mxu0
    %v1581 = vadd.f32 %v1568, %v1580
    %v1582 = vpop.f32.mrf.mxu0
    %1583 = vdwg.mxu0
    %1584 = vmatpush.bf16.msra.mxu0 %v1278
    %1585 = vmatpush.bf16.msra.mxu0 %v1274
    %1586 = vmatpush.bf16.msra.mxu0 %v1270
    %1587 = vmatpush.bf16.msra.mxu0 %v1266
    %1588 = vmatpush.bf16.msra.mxu0 %v1262
    %1589 = vmatpush.bf16.msra.mxu0 %v1258
    %1590 = vmatpush.bf16.msra.mxu0 %v1254
    %1591 = vmatpush.bf16.msra.mxu0 %v1250
    %1592 = vmatmul.bf16.gmra.mxu0 %v378
    %v1593 = vpop.f32.mrf.mxu0
    %v1594 = vadd.f32 %v1581, %v1593
    %v1595 = vpop.f32.mrf.mxu0
    %1596 = vdwg.mxu0
    %1597 = vmatpush.bf16.msra.mxu0 %v1087
    %1598 = vmatpush.bf16.msra.mxu0 %v1083
    %1599 = vmatpush.bf16.msra.mxu0 %v1079
    %1600 = vmatpush.bf16.msra.mxu0 %v1075
    %1601 = vmatpush.bf16.msra.mxu0 %v1071
    %1602 = vmatpush.bf16.msra.mxu0 %v1067
    %1603 = vmatpush.bf16.msra.mxu0 %v1063
    %1604 = vmatpush.bf16.msra.mxu0 %v1059
    %1605 = vmatmul.bf16.gmra.mxu0 %v372
    %v1606 = vpop.f32.mrf.mxu0
    %v1607 = vadd.f32 %v354, %v1606
    %v1608 = vpop.f32.mrf.mxu0
    %1609 = vdwg.mxu0
    %1610 = vmatpush.bf16.msra.mxu0 %v1119
    %1611 = vmatpush.bf16.msra.mxu0 %v1115
    %1612 = vmatpush.bf16.msra.mxu0 %v1111
    %1613 = vmatpush.bf16.msra.mxu0 %v1107
    %1614 = vmatpush.bf16.msra.mxu0 %v1103
    %1615 = vmatpush.bf16.msra.mxu0 %v1099
    %1616 = vmatpush.bf16.msra.mxu0 %v1095
    %1617 = vmatpush.bf16.msra.mxu0 %v1091
    %1618 = vmatmul.bf16.gmra.mxu0 %v373
    %v1619 = vpop.f32.mrf.mxu0
    %v1620 = vadd.f32 %v1607, %v1619
    %v1621 = vpop.f32.mrf.mxu0
    %1622 = vdwg.mxu0
    %1623 = vmatpush.bf16.msra.mxu0 %v1151
    %1624 = vmatpush.bf16.msra.mxu0 %v1147
    %1625 = vmatpush.bf16.msra.mxu0 %v1143
    %1626 = vmatpush.bf16.msra.mxu0 %v1139
    %1627 = vmatpush.bf16.msra.mxu0 %v1135
    %1628 = vmatpush.bf16.msra.mxu0 %v1131
    %1629 = vmatpush.bf16.msra.mxu0 %v1127
    %1630 = vmatpush.bf16.msra.mxu0 %v1123
    %1631 = vmatmul.bf16.gmra.mxu0 %v374
    %v1632 = vpop.f32.mrf.mxu0
    %v1633 = vadd.f32 %v1620, %v1632
    %v1634 = vpop.f32.mrf.mxu0
    %1635 = vdwg.mxu0
    %1636 = vmatpush.bf16.msra.mxu0 %v1183
    %1637 = vmatpush.bf16.msra.mxu0 %v1179
    %1638 = vmatpush.bf16.msra.mxu0 %v1175
    %1639 = vmatpush.bf16.msra.mxu0 %v1171
    %1640 = vmatpush.bf16.msra.mxu0 %v1167
    %1641 = vmatpush.bf16.msra.mxu0 %v1163
    %1642 = vmatpush.bf16.msra.mxu0 %v1159
    %1643 = vmatpush.bf16.msra.mxu0 %v1155
    %1644 = vmatmul.bf16.gmra.mxu0 %v375
    %v1645 = vpop.f32.mrf.mxu0
    %v1646 = vadd.f32 %v1633, %v1645
    %v1647 = vpop.f32.mrf.mxu0
    %1648 = vdwg.mxu0
    %1649 = vmatpush.bf16.msra.mxu0 %v1215
    %1650 = vmatpush.bf16.msra.mxu0 %v1211
    %1651 = vmatpush.bf16.msra.mxu0 %v1207
    %1652 = vmatpush.bf16.msra.mxu0 %v1203
    %1653 = vmatpush.bf16.msra.mxu0 %v1199
    %1654 = vmatpush.bf16.msra.mxu0 %v1195
    %1655 = vmatpush.bf16.msra.mxu0 %v1191
    %1656 = vmatpush.bf16.msra.mxu0 %v1187
    %1657 = vmatmul.bf16.gmra.mxu0 %v376
    %v1658 = vpop.f32.mrf.mxu0
    %v1659 = vadd.f32 %v1646, %v1658
    %v1660 = vpop.f32.mrf.mxu0
    %1661 = vdwg.mxu0
    %1662 = vmatpush.bf16.msra.mxu0 %v1247
    %1663 = vmatpush.bf16.msra.mxu0 %v1243
    %1664 = vmatpush.bf16.msra.mxu0 %v1239
    %1665 = vmatpush.bf16.msra.mxu0 %v1235
    %1666 = vmatpush.bf16.msra.mxu0 %v1231
    %1667 = vmatpush.bf16.msra.mxu0 %v1227
    %1668 = vmatpush.bf16.msra.mxu0 %v1223
    %1669 = vmatpush.bf16.msra.mxu0 %v1219
    %1670 = vmatmul.bf16.gmra.mxu0 %v377
    %v1671 = vpop.f32.mrf.mxu0
    %v1672 = vadd.f32 %v1659, %v1671
    %v1673 = vpop.f32.mrf.mxu0
    %1674 = vdwg.mxu0
    %1675 = vmatpush.bf16.msra.mxu0 %v1279
    %1676 = vmatpush.bf16.msra.mxu0 %v1275
    %1677 = vmatpush.bf16.msra.mxu0 %v1271
    %1678 = vmatpush.bf16.msra.mxu0 %v1267
    %1679 = vmatpush.bf16.msra.mxu0 %v1263
    %1680 = vmatpush.bf16.msra.mxu0 %v1259
    %1681 = vmatpush.bf16.msra.mxu0 %v1255
    %1682 = vmatpush.bf16.msra.mxu0 %v1251
    %1683 = vmatmul.bf16.gmra.mxu0 %v378
    %v1684 = vpop.f32.mrf.mxu0
    %v1685 = vadd.f32 %v1672, %v1684
    %v1686 = vpop.f32.mrf.mxu0
    %1687 = vdwg.mxu0
    %1688 = vmatpush.bf16.msra.mxu0 %v1088
    %1689 = vmatpush.bf16.msra.mxu0 %v1084
    %1690 = vmatpush.bf16.msra.mxu0 %v1080
    %1691 = vmatpush.bf16.msra.mxu0 %v1076
    %1692 = vmatpush.bf16.msra.mxu0 %v1072
    %1693 = vmatpush.bf16.msra.mxu0 %v1068
    %1694 = vmatpush.bf16.msra.mxu0 %v1064
    %1695 = vmatpush.bf16.msra.mxu0 %v1060
    %1696 = vmatmul.bf16.gmra.mxu0 %v372
    %v1697 = vpop.f32.mrf.mxu0
    %v1698 = vadd.f32 %v355, %v1697
    %v1699 = vpop.f32.mrf.mxu0
    %1700 = vdwg.mxu0
    %1701 = vmatpush.bf16.msra.mxu0 %v1120
    %1702 = vmatpush.bf16.msra.mxu0 %v1116
    %1703 = vmatpush.bf16.msra.mxu0 %v1112
    %1704 = vmatpush.bf16.msra.mxu0 %v1108
    %1705 = vmatpush.bf16.msra.mxu0 %v1104
    %1706 = vmatpush.bf16.msra.mxu0 %v1100
    %1707 = vmatpush.bf16.msra.mxu0 %v1096
    %1708 = vmatpush.bf16.msra.mxu0 %v1092
    %1709 = vmatmul.bf16.gmra.mxu0 %v373
    %v1710 = vpop.f32.mrf.mxu0
    %v1711 = vadd.f32 %v1698, %v1710
    %v1712 = vpop.f32.mrf.mxu0
    %1713 = vdwg.mxu0
    %1714 = vmatpush.bf16.msra.mxu0 %v1152
    %1715 = vmatpush.bf16.msra.mxu0 %v1148
    %1716 = vmatpush.bf16.msra.mxu0 %v1144
    %1717 = vmatpush.bf16.msra.mxu0 %v1140
    %1718 = vmatpush.bf16.msra.mxu0 %v1136
    %1719 = vmatpush.bf16.msra.mxu0 %v1132
    %1720 = vmatpush.bf16.msra.mxu0 %v1128
    %1721 = vmatpush.bf16.msra.mxu0 %v1124
    %1722 = vmatmul.bf16.gmra.mxu0 %v374
    %v1723 = vpop.f32.mrf.mxu0
    %v1724 = vadd.f32 %v1711, %v1723
    %v1725 = vpop.f32.mrf.mxu0
    %1726 = vdwg.mxu0
    %1727 = vmatpush.bf16.msra.mxu0 %v1184
    %1728 = vmatpush.bf16.msra.mxu0 %v1180
    %1729 = vmatpush.bf16.msra.mxu0 %v1176
    %1730 = vmatpush.bf16.msra.mxu0 %v1172
    %1731 = vmatpush.bf16.msra.mxu0 %v1168
    %1732 = vmatpush.bf16.msra.mxu0 %v1164
    %1733 = vmatpush.bf16.msra.mxu0 %v1160
    %1734 = vmatpush.bf16.msra.mxu0 %v1156
    %1735 = vmatmul.bf16.gmra.mxu0 %v375
    %v1736 = vpop.f32.mrf.mxu0
    %v1737 = vadd.f32 %v1724, %v1736
    %v1738 = vpop.f32.mrf.mxu0
    %1739 = vdwg.mxu0
    %1740 = vmatpush.bf16.msra.mxu0 %v1216
    %1741 = vmatpush.bf16.msra.mxu0 %v1212
    %1742 = vmatpush.bf16.msra.mxu0 %v1208
    %1743 = vmatpush.bf16.msra.mxu0 %v1204
    %1744 = vmatpush.bf16.msra.mxu0 %v1200
    %1745 = vmatpush.bf16.msra.mxu0 %v1196
    %1746 = vmatpush.bf16.msra.mxu0 %v1192
    %1747 = vmatpush.bf16.msra.mxu0 %v1188
    %1748 = vmatmul.bf16.gmra.mxu0 %v376
    %v1749 = vpop.f32.mrf.mxu0
    %v1750 = vadd.f32 %v1737, %v1749
    %v1751 = vpop.f32.mrf.mxu0
    %1752 = vdwg.mxu0
    %1753 = vmatpush.bf16.msra.mxu0 %v1248
    %1754 = vmatpush.bf16.msra.mxu0 %v1244
    %1755 = vmatpush.bf16.msra.mxu0 %v1240
    %1756 = vmatpush.bf16.msra.mxu0 %v1236
    %1757 = vmatpush.bf16.msra.mxu0 %v1232
    %1758 = vmatpush.bf16.msra.mxu0 %v1228
    %1759 = vmatpush.bf16.msra.mxu0 %v1224
    %1760 = vmatpush.bf16.msra.mxu0 %v1220
    %1761 = vmatmul.bf16.gmra.mxu0 %v377
    %v1762 = vpop.f32.mrf.mxu0
    %v1763 = vadd.f32 %v1750, %v1762
    %v1764 = vpop.f32.mrf.mxu0
    %1765 = vdwg.mxu0
    %1766 = vmatpush.bf16.msra.mxu0 %v1280
    %1767 = vmatpush.bf16.msra.mxu0 %v1276
    %1768 = vmatpush.bf16.msra.mxu0 %v1272
    %1769 = vmatpush.bf16.msra.mxu0 %v1268
    %1770 = vmatpush.bf16.msra.mxu0 %v1264
    %1771 = vmatpush.bf16.msra.mxu0 %v1260
    %1772 = vmatpush.bf16.msra.mxu0 %v1256
    %1773 = vmatpush.bf16.msra.mxu0 %v1252
    %1774 = vmatmul.bf16.gmra.mxu0 %v378
    %v1775 = vpop.f32.mrf.mxu0
    %v1776 = vadd.f32 %v1763, %v1775
    %v1777 = vpop.f32.mrf.mxu0
    %1778 = vdwg.mxu0
    %1779 = vmatpush.bf16.msra.mxu0 %v1089
    %1780 = vmatpush.bf16.msra.mxu0 %v1085
    %1781 = vmatpush.bf16.msra.mxu0 %v1081
    %1782 = vmatpush.bf16.msra.mxu0 %v1077
    %1783 = vmatpush.bf16.msra.mxu0 %v1073
    %1784 = vmatpush.bf16.msra.mxu0 %v1069
    %1785 = vmatpush.bf16.msra.mxu0 %v1065
    %1786 = vmatpush.bf16.msra.mxu0 %v1061
    %1787 = vmatmul.bf16.gmra.mxu0 %v372
    %v1788 = vpop.f32.mrf.mxu0
    %v1789 = vadd.f32 %v356, %v1788
    %v1790 = vpop.f32.mrf.mxu0
    %1791 = vdwg.mxu0
    %1792 = vmatpush.bf16.msra.mxu0 %v1121
    %1793 = vmatpush.bf16.msra.mxu0 %v1117
    %1794 = vmatpush.bf16.msra.mxu0 %v1113
    %1795 = vmatpush.bf16.msra.mxu0 %v1109
    %1796 = vmatpush.bf16.msra.mxu0 %v1105
    %1797 = vmatpush.bf16.msra.mxu0 %v1101
    %1798 = vmatpush.bf16.msra.mxu0 %v1097
    %1799 = vmatpush.bf16.msra.mxu0 %v1093
    %1800 = vmatmul.bf16.gmra.mxu0 %v373
    %v1801 = vpop.f32.mrf.mxu0
    %v1802 = vadd.f32 %v1789, %v1801
    %v1803 = vpop.f32.mrf.mxu0
    %1804 = vdwg.mxu0
    %1805 = vmatpush.bf16.msra.mxu0 %v1153
    %1806 = vmatpush.bf16.msra.mxu0 %v1149
    %1807 = vmatpush.bf16.msra.mxu0 %v1145
    %1808 = vmatpush.bf16.msra.mxu0 %v1141
    %1809 = vmatpush.bf16.msra.mxu0 %v1137
    %1810 = vmatpush.bf16.msra.mxu0 %v1133
    %1811 = vmatpush.bf16.msra.mxu0 %v1129
    %1812 = vmatpush.bf16.msra.mxu0 %v1125
    %1813 = vmatmul.bf16.gmra.mxu0 %v374
    %v1814 = vpop.f32.mrf.mxu0
    %v1815 = vadd.f32 %v1802, %v1814
    %v1816 = vpop.f32.mrf.mxu0
    %1817 = vdwg.mxu0
    %1818 = vmatpush.bf16.msra.mxu0 %v1185
    %1819 = vmatpush.bf16.msra.mxu0 %v1181
    %1820 = vmatpush.bf16.msra.mxu0 %v1177
    %1821 = vmatpush.bf16.msra.mxu0 %v1173
    %1822 = vmatpush.bf16.msra.mxu0 %v1169
    %1823 = vmatpush.bf16.msra.mxu0 %v1165
    %1824 = vmatpush.bf16.msra.mxu0 %v1161
    %1825 = vmatpush.bf16.msra.mxu0 %v1157
    %1826 = vmatmul.bf16.gmra.mxu0 %v375
    %v1827 = vpop.f32.mrf.mxu0
    %v1828 = vadd.f32 %v1815, %v1827
    %v1829 = vpop.f32.mrf.mxu0
    %1830 = vdwg.mxu0
    %1831 = vmatpush.bf16.msra.mxu0 %v1217
    %1832 = vmatpush.bf16.msra.mxu0 %v1213
    %1833 = vmatpush.bf16.msra.mxu0 %v1209
    %1834 = vmatpush.bf16.msra.mxu0 %v1205
    %1835 = vmatpush.bf16.msra.mxu0 %v1201
    %1836 = vmatpush.bf16.msra.mxu0 %v1197
    %1837 = vmatpush.bf16.msra.mxu0 %v1193
    %1838 = vmatpush.bf16.msra.mxu0 %v1189
    %1839 = vmatmul.bf16.gmra.mxu0 %v376
    %v1840 = vpop.f32.mrf.mxu0
    %v1841 = vadd.f32 %v1828, %v1840
    %v1842 = vpop.f32.mrf.mxu0
    %1843 = vdwg.mxu0
    %1844 = vmatpush.bf16.msra.mxu0 %v1249
    %1845 = vmatpush.bf16.msra.mxu0 %v1245
    %1846 = vmatpush.bf16.msra.mxu0 %v1241
    %1847 = vmatpush.bf16.msra.mxu0 %v1237
    %1848 = vmatpush.bf16.msra.mxu0 %v1233
    %1849 = vmatpush.bf16.msra.mxu0 %v1229
    %1850 = vmatpush.bf16.msra.mxu0 %v1225
    %1851 = vmatpush.bf16.msra.mxu0 %v1221
    %1852 = vmatmul.bf16.gmra.mxu0 %v377
    %v1853 = vpop.f32.mrf.mxu0
    %v1854 = vadd.f32 %v1841, %v1853
    %v1855 = vpop.f32.mrf.mxu0
    %1856 = vdwg.mxu0
    %1857 = vmatpush.bf16.msra.mxu0 %v1281
    %1858 = vmatpush.bf16.msra.mxu0 %v1277
    %1859 = vmatpush.bf16.msra.mxu0 %v1273
    %1860 = vmatpush.bf16.msra.mxu0 %v1269
    %1861 = vmatpush.bf16.msra.mxu0 %v1265
    %1862 = vmatpush.bf16.msra.mxu0 %v1261
    %1863 = vmatpush.bf16.msra.mxu0 %v1257
    %1864 = vmatpush.bf16.msra.mxu0 %v1253
    %1865 = vmatmul.bf16.gmra.mxu0 %v378
    %v1866 = vpop.f32.mrf.mxu0
    %v1867 = vadd.f32 %v1854, %v1866
    %v1868 = vpop.f32.mrf.mxu0
    %1869 = vdwg.mxu0
    %v1870 = vmax.f32 %v1594, 0.0
    %v1871 = vmax.f32 %v1685, 0.0
    %v1872 = vmax.f32 %v1776, 0.0
    %v1873 = vmax.f32 %v1867, 0.0
    %v1874 = vpack.c.bf16 %v1870, %v1870
    %v1875 = vpack.c.bf16 %v1871, %v1871
    %v1876 = vpack.c.bf16 %v1872, %v1872
    %v1877 = vpack.c.bf16 %v1873, %v1873
    %v1878 = vld [vmem:[#allocation8] sm:$0xff]
    %v1879 = vld [vmem:[#allocation8 + $0x8] sm:$0xff]
    %v1880 = vld [vmem:[#allocation8 + $0x10] sm:$0xff]
    %v1881 = vld [vmem:[#allocation8 + $0x18] sm:$0xff]
    %v1882 = vld [vmem:[#allocation8 + $0x20] sm:$0xff]
    %v1883 = vld [vmem:[#allocation8 + $0x28] sm:$0xff]
    %v1884 = vld [vmem:[#allocation8 + $0x30] sm:$0xff]
    %v1885 = vld [vmem:[#allocation8 + $0x38] sm:$0xff]
    %v1886 = vld [vmem:[#allocation8 + $0x40] sm:$0xff]
    %v1887 = vld [vmem:[#allocation8 + $0x48] sm:$0xff]
    %v1888 = vld [vmem:[#allocation8 + $0x50] sm:$0xff]
    %v1889 = vld [vmem:[#allocation8 + $0x58] sm:$0xff]
    %v1890 = vld [vmem:[#allocation8 + $0x60] sm:$0xff]
    %v1891 = vld [vmem:[#allocation8 + $0x68] sm:$0xff]
    %v1892 = vld [vmem:[#allocation8 + $0x70] sm:$0xff]
    %v1893 = vld [vmem:[#allocation8 + $0x78] sm:$0xff]
    %v1894 = vld [vmem:[#allocation8 + $0x80] sm:$0xff]
    %v1895 = vld [vmem:[#allocation8 + $0x88] sm:$0xff]
    %v1896 = vld [vmem:[#allocation8 + $0x90] sm:$0xff]
    %v1897 = vld [vmem:[#allocation8 + $0x98] sm:$0xff]
    %v1898 = vld [vmem:[#allocation8 + $0xa0] sm:$0xff]
    %v1899 = vld [vmem:[#allocation8 + $0xa8] sm:$0xff]
    %v1900 = vld [vmem:[#allocation8 + $0xb0] sm:$0xff]
    %v1901 = vld [vmem:[#allocation8 + $0xb8] sm:$0xff]
    %v1902 = vld [vmem:[#allocation8 + $0xc0] sm:$0xff]
    %v1903 = vld [vmem:[#allocation8 + $0xc8] sm:$0xff]
    %v1904 = vld [vmem:[#allocation8 + $0xd0] sm:$0xff]
    %v1905 = vld [vmem:[#allocation8 + $0xd8] sm:$0xff]
    %v1906 = vld [vmem:[#allocation8 + $0xe0] sm:$0xff]
    %v1907 = vld [vmem:[#allocation8 + $0xe8] sm:$0xff]
    %v1908 = vld [vmem:[#allocation8 + $0xf0] sm:$0xff]
    %v1909 = vld [vmem:[#allocation8 + $0xf8] sm:$0xff]
    %v1910 = vld [vmem:[#allocation8 + $0x100] sm:$0xff]
    %v1911 = vld [vmem:[#allocation8 + $0x108] sm:$0xff]
    %v1912 = vld [vmem:[#allocation8 + $0x110] sm:$0xff]
    %v1913 = vld [vmem:[#allocation8 + $0x118] sm:$0xff]
    %v1914 = vld [vmem:[#allocation8 + $0x120] sm:$0xff]
    %v1915 = vld [vmem:[#allocation8 + $0x128] sm:$0xff]
    %v1916 = vld [vmem:[#allocation8 + $0x130] sm:$0xff]
    %v1917 = vld [vmem:[#allocation8 + $0x138] sm:$0xff]
    %v1918 = vld [vmem:[#allocation8 + $0x140] sm:$0xff]
    %v1919 = vld [vmem:[#allocation8 + $0x148] sm:$0xff]
    %v1920 = vld [vmem:[#allocation8 + $0x150] sm:$0xff]
    %v1921 = vld [vmem:[#allocation8 + $0x158] sm:$0xff]
    %v1922 = vld [vmem:[#allocation8 + $0x160] sm:$0xff]
    %v1923 = vld [vmem:[#allocation8 + $0x168] sm:$0xff]
    %v1924 = vld [vmem:[#allocation8 + $0x170] sm:$0xff]
    %v1925 = vld [vmem:[#allocation8 + $0x178] sm:$0xff]
    %v1926 = vld [vmem:[#allocation8 + $0x180] sm:$0xff]
    %v1927 = vld [vmem:[#allocation8 + $0x188] sm:$0xff]
    %v1928 = vld [vmem:[#allocation8 + $0x190] sm:$0xff]
    %v1929 = vld [vmem:[#allocation8 + $0x198] sm:$0xff]
    %v1930 = vld [vmem:[#allocation8 + $0x1a0] sm:$0xff]
    %v1931 = vld [vmem:[#allocation8 + $0x1a8] sm:$0xff]
    %v1932 = vld [vmem:[#allocation8 + $0x1b0] sm:$0xff]
    %v1933 = vld [vmem:[#allocation8 + $0x1b8] sm:$0xff]
    %v1934 = vld [vmem:[#allocation8 + $0x1c0] sm:$0xff]
    %v1935 = vld [vmem:[#allocation8 + $0x1c8] sm:$0xff]
    %v1936 = vld [vmem:[#allocation8 + $0x1d0] sm:$0xff]
    %v1937 = vld [vmem:[#allocation8 + $0x1d8] sm:$0xff]
    %v1938 = vld [vmem:[#allocation8 + $0x1e0] sm:$0xff]
    %v1939 = vld [vmem:[#allocation8 + $0x1e8] sm:$0xff]
    %v1940 = vld [vmem:[#allocation8 + $0x1f0] sm:$0xff]
    %v1941 = vld [vmem:[#allocation8 + $0x1f8] sm:$0xff]
    %v1942 = vld [vmem:[%s4] sm:$0x3]
    %v1944 = vperm.slane %v1942, 0
    %v1945 = vperm.slane %v1942, 1
    %v2012 = vunpack.c.l.b16 %v1878
    %v2013 = vunpack.c.h.b16 %v1878
    %v2014 = vunpack.c.l.b16 %v1879
    %v2015 = vunpack.c.h.b16 %v1879
    %v2016 = vunpack.c.l.b16 %v1880
    %v2017 = vunpack.c.h.b16 %v1880
    %v2018 = vunpack.c.l.b16 %v1881
    %v2019 = vunpack.c.h.b16 %v1881
    %v2020 = vunpack.c.l.b16 %v1882
    %v2021 = vunpack.c.h.b16 %v1882
    %v2022 = vunpack.c.l.b16 %v1883
    %v2023 = vunpack.c.h.b16 %v1883
    %v2024 = vunpack.c.l.b16 %v1884
    %v2025 = vunpack.c.h.b16 %v1884
    %v2026 = vunpack.c.l.b16 %v1885
    %v2027 = vunpack.c.h.b16 %v1885
    %v2028 = vunpack.c.l.b16 %v1886
    %v2029 = vunpack.c.h.b16 %v1886
    %v2030 = vunpack.c.l.b16 %v1887
    %v2031 = vunpack.c.h.b16 %v1887
    %v2032 = vunpack.c.l.b16 %v1888
    %v2033 = vunpack.c.h.b16 %v1888
    %v2034 = vunpack.c.l.b16 %v1889
    %v2035 = vunpack.c.h.b16 %v1889
    %v2036 = vunpack.c.l.b16 %v1890
    %v2037 = vunpack.c.h.b16 %v1890
    %v2038 = vunpack.c.l.b16 %v1891
    %v2039 = vunpack.c.h.b16 %v1891
    %v2040 = vunpack.c.l.b16 %v1892
    %v2041 = vunpack.c.h.b16 %v1892
    %v2042 = vunpack.c.l.b16 %v1893
    %v2043 = vunpack.c.h.b16 %v1893
    %v2044 = vunpack.c.l.b16 %v1894
    %v2045 = vunpack.c.h.b16 %v1894
    %v2046 = vunpack.c.l.b16 %v1895
    %v2047 = vunpack.c.h.b16 %v1895
    %v2048 = vunpack.c.l.b16 %v1896
    %v2049 = vunpack.c.h.b16 %v1896
    %v2050 = vunpack.c.l.b16 %v1897
    %v2051 = vunpack.c.h.b16 %v1897
    %v2052 = vunpack.c.l.b16 %v1898
    %v2053 = vunpack.c.h.b16 %v1898
    %v2054 = vunpack.c.l.b16 %v1899
    %v2055 = vunpack.c.h.b16 %v1899
    %v2056 = vunpack.c.l.b16 %v1900
    %v2057 = vunpack.c.h.b16 %v1900
    %v2058 = vunpack.c.l.b16 %v1901
    %v2059 = vunpack.c.h.b16 %v1901
    %v2060 = vunpack.c.l.b16 %v1902
    %v2061 = vunpack.c.h.b16 %v1902
    %v2062 = vunpack.c.l.b16 %v1903
    %v2063 = vunpack.c.h.b16 %v1903
    %v2064 = vunpack.c.l.b16 %v1904
    %v2065 = vunpack.c.h.b16 %v1904
    %v2066 = vunpack.c.l.b16 %v1905
    %v2067 = vunpack.c.h.b16 %v1905
    %v2068 = vunpack.c.l.b16 %v1906
    %v2069 = vunpack.c.h.b16 %v1906
    %v2070 = vunpack.c.l.b16 %v1907
    %v2071 = vunpack.c.h.b16 %v1907
    %v2072 = vunpack.c.l.b16 %v1908
    %v2073 = vunpack.c.h.b16 %v1908
    %v2074 = vunpack.c.l.b16 %v1909
    %v2075 = vunpack.c.h.b16 %v1909
    %v2076 = vunpack.c.l.b16 %v1910
    %v2077 = vunpack.c.h.b16 %v1910
    %v2078 = vunpack.c.l.b16 %v1911
    %v2079 = vunpack.c.h.b16 %v1911
    %v2080 = vunpack.c.l.b16 %v1912
    %v2081 = vunpack.c.h.b16 %v1912
    %v2082 = vunpack.c.l.b16 %v1913
    %v2083 = vunpack.c.h.b16 %v1913
    %v2084 = vunpack.c.l.b16 %v1914
    %v2085 = vunpack.c.h.b16 %v1914
    %v2086 = vunpack.c.l.b16 %v1915
    %v2087 = vunpack.c.h.b16 %v1915
    %v2088 = vunpack.c.l.b16 %v1916
    %v2089 = vunpack.c.h.b16 %v1916
    %v2090 = vunpack.c.l.b16 %v1917
    %v2091 = vunpack.c.h.b16 %v1917
    %v2092 = vunpack.c.l.b16 %v1918
    %v2093 = vunpack.c.h.b16 %v1918
    %v2094 = vunpack.c.l.b16 %v1919
    %v2095 = vunpack.c.h.b16 %v1919
    %v2096 = vunpack.c.l.b16 %v1920
    %v2097 = vunpack.c.h.b16 %v1920
    %v2098 = vunpack.c.l.b16 %v1921
    %v2099 = vunpack.c.h.b16 %v1921
    %v2100 = vunpack.c.l.b16 %v1922
    %v2101 = vunpack.c.h.b16 %v1922
    %v2102 = vunpack.c.l.b16 %v1923
    %v2103 = vunpack.c.h.b16 %v1923
    %v2104 = vunpack.c.l.b16 %v1924
    %v2105 = vunpack.c.h.b16 %v1924
    %v2106 = vunpack.c.l.b16 %v1925
    %v2107 = vunpack.c.h.b16 %v1925
    %v2108 = vunpack.c.l.b16 %v1926
    %v2109 = vunpack.c.h.b16 %v1926
    %v2110 = vunpack.c.l.b16 %v1927
    %v2111 = vunpack.c.h.b16 %v1927
    %v2112 = vunpack.c.l.b16 %v1928
    %v2113 = vunpack.c.h.b16 %v1928
    %v2114 = vunpack.c.l.b16 %v1929
    %v2115 = vunpack.c.h.b16 %v1929
    %v2116 = vunpack.c.l.b16 %v1930
    %v2117 = vunpack.c.h.b16 %v1930
    %v2118 = vunpack.c.l.b16 %v1931
    %v2119 = vunpack.c.h.b16 %v1931
    %v2120 = vunpack.c.l.b16 %v1932
    %v2121 = vunpack.c.h.b16 %v1932
    %v2122 = vunpack.c.l.b16 %v1933
    %v2123 = vunpack.c.h.b16 %v1933
    %v2124 = vunpack.c.l.b16 %v1934
    %v2125 = vunpack.c.h.b16 %v1934
    %v2126 = vunpack.c.l.b16 %v1935
    %v2127 = vunpack.c.h.b16 %v1935
    %v2128 = vunpack.c.l.b16 %v1936
    %v2129 = vunpack.c.h.b16 %v1936
    %v2130 = vunpack.c.l.b16 %v1937
    %v2131 = vunpack.c.h.b16 %v1937
    %v2132 = vunpack.c.l.b16 %v1938
    %v2133 = vunpack.c.h.b16 %v1938
    %v2134 = vunpack.c.l.b16 %v1939
    %v2135 = vunpack.c.h.b16 %v1939
    %v2136 = vunpack.c.l.b16 %v1940
    %v2137 = vunpack.c.h.b16 %v1940
    %v2138 = vunpack.c.l.b16 %v1941
    %v2139 = vunpack.c.h.b16 %v1941
    %v2140 = vpack.c.b16 %v2014, %v2012
    %v2141 = vpack.c.b16 %v2015, %v2013
    %v2142 = vpack.c.b16 %v2018, %v2016
    %v2143 = vpack.c.b16 %v2019, %v2017
    %v2144 = vpack.c.b16 %v2022, %v2020
    %v2145 = vpack.c.b16 %v2023, %v2021
    %v2146 = vpack.c.b16 %v2026, %v2024
    %v2147 = vpack.c.b16 %v2027, %v2025
    %v2148 = vpack.c.b16 %v2030, %v2028
    %v2149 = vpack.c.b16 %v2031, %v2029
    %v2150 = vpack.c.b16 %v2034, %v2032
    %v2151 = vpack.c.b16 %v2035, %v2033
    %v2152 = vpack.c.b16 %v2038, %v2036
    %v2153 = vpack.c.b16 %v2039, %v2037
    %v2154 = vpack.c.b16 %v2042, %v2040
    %v2155 = vpack.c.b16 %v2043, %v2041
    %v2156 = vpack.c.b16 %v2046, %v2044
    %v2157 = vpack.c.b16 %v2047, %v2045
    %v2158 = vpack.c.b16 %v2050, %v2048
    %v2159 = vpack.c.b16 %v2051, %v2049
    %v2160 = vpack.c.b16 %v2054, %v2052
    %v2161 = vpack.c.b16 %v2055, %v2053
    %v2162 = vpack.c.b16 %v2058, %v2056
    %v2163 = vpack.c.b16 %v2059, %v2057
    %v2164 = vpack.c.b16 %v2062, %v2060
    %v2165 = vpack.c.b16 %v2063, %v2061
    %v2166 = vpack.c.b16 %v2066, %v2064
    %v2167 = vpack.c.b16 %v2067, %v2065
    %v2168 = vpack.c.b16 %v2070, %v2068
    %v2169 = vpack.c.b16 %v2071, %v2069
    %v2170 = vpack.c.b16 %v2074, %v2072
    %v2171 = vpack.c.b16 %v2075, %v2073
    %v2172 = vpack.c.b16 %v2078, %v2076
    %v2173 = vpack.c.b16 %v2079, %v2077
    %v2174 = vpack.c.b16 %v2082, %v2080
    %v2175 = vpack.c.b16 %v2083, %v2081
    %v2176 = vpack.c.b16 %v2086, %v2084
    %v2177 = vpack.c.b16 %v2087, %v2085
    %v2178 = vpack.c.b16 %v2090, %v2088
    %v2179 = vpack.c.b16 %v2091, %v2089
    %v2180 = vpack.c.b16 %v2094, %v2092
    %v2181 = vpack.c.b16 %v2095, %v2093
    %v2182 = vpack.c.b16 %v2098, %v2096
    %v2183 = vpack.c.b16 %v2099, %v2097
    %v2184 = vpack.c.b16 %v2102, %v2100
    %v2185 = vpack.c.b16 %v2103, %v2101
    %v2186 = vpack.c.b16 %v2106, %v2104
    %v2187 = vpack.c.b16 %v2107, %v2105
    %v2188 = vpack.c.b16 %v2110, %v2108
    %v2189 = vpack.c.b16 %v2111, %v2109
    %v2190 = vpack.c.b16 %v2114, %v2112
    %v2191 = vpack.c.b16 %v2115, %v2113
    %v2192 = vpack.c.b16 %v2118, %v2116
    %v2193 = vpack.c.b16 %v2119, %v2117
    %v2194 = vpack.c.b16 %v2122, %v2120
    %v2195 = vpack.c.b16 %v2123, %v2121
    %v2196 = vpack.c.b16 %v2126, %v2124
    %v2197 = vpack.c.b16 %v2127, %v2125
    %v2198 = vpack.c.b16 %v2130, %v2128
    %v2199 = vpack.c.b16 %v2131, %v2129
    %v2200 = vpack.c.b16 %v2134, %v2132
    %v2201 = vpack.c.b16 %v2135, %v2133
    %v2202 = vpack.c.b16 %v2138, %v2136
    %v2203 = vpack.c.b16 %v2139, %v2137
    %2268 = vmatpush.bf16.msra.mxu0 %v2154
    %2269 = vmatpush.bf16.msra.mxu0 %v2152
    %2270 = vmatpush.bf16.msra.mxu0 %v2150
    %2271 = vmatpush.bf16.msra.mxu0 %v2148
    %2272 = vmatpush.bf16.msra.mxu0 %v2146
    %2273 = vmatpush.bf16.msra.mxu0 %v2144
    %2274 = vmatpush.bf16.msra.mxu0 %v2142
    %2275 = vmatpush.bf16.msra.mxu0 %v2140
    %2276 = vmatmul.bf16.gmra.mxu0 %v1874
    %v2277 = vpop.f32.mrf.mxu0
    %v2278 = vadd.f32 %v1944, %v2277
    %v2279 = vpop.f32.mrf.mxu0
    %2280 = vdwg.mxu0
    %2281 = vmatpush.bf16.msra.mxu0 %v2170
    %2282 = vmatpush.bf16.msra.mxu0 %v2168
    %2283 = vmatpush.bf16.msra.mxu0 %v2166
    %2284 = vmatpush.bf16.msra.mxu0 %v2164
    %2285 = vmatpush.bf16.msra.mxu0 %v2162
    %2286 = vmatpush.bf16.msra.mxu0 %v2160
    %2287 = vmatpush.bf16.msra.mxu0 %v2158
    %2288 = vmatpush.bf16.msra.mxu0 %v2156
    %2289 = vmatmul.bf16.gmra.mxu0 %v1875
    %v2290 = vpop.f32.mrf.mxu0
    %v2291 = vadd.f32 %v2278, %v2290
    %v2292 = vpop.f32.mrf.mxu0
    %2293 = vdwg.mxu0
    %2294 = vmatpush.bf16.msra.mxu0 %v2186
    %2295 = vmatpush.bf16.msra.mxu0 %v2184
    %2296 = vmatpush.bf16.msra.mxu0 %v2182
    %2297 = vmatpush.bf16.msra.mxu0 %v2180
    %2298 = vmatpush.bf16.msra.mxu0 %v2178
    %2299 = vmatpush.bf16.msra.mxu0 %v2176
    %2300 = vmatpush.bf16.msra.mxu0 %v2174
    %2301 = vmatpush.bf16.msra.mxu0 %v2172
    %2302 = vmatmul.bf16.gmra.mxu0 %v1876
    %v2303 = vpop.f32.mrf.mxu0
    %v2304 = vadd.f32 %v2291, %v2303
    %v2305 = vpop.f32.mrf.mxu0
    %2306 = vdwg.mxu0
    %2307 = vmatpush.bf16.msra.mxu0 %v2202
    %2308 = vmatpush.bf16.msra.mxu0 %v2200
    %2309 = vmatpush.bf16.msra.mxu0 %v2198
    %2310 = vmatpush.bf16.msra.mxu0 %v2196
    %2311 = vmatpush.bf16.msra.mxu0 %v2194
    %2312 = vmatpush.bf16.msra.mxu0 %v2192
    %2313 = vmatpush.bf16.msra.mxu0 %v2190
    %2314 = vmatpush.bf16.msra.mxu0 %v2188
    %2315 = vmatmul.bf16.gmra.mxu0 %v1877
    %v2316 = vpop.f32.mrf.mxu0
    %v2317 = vadd.f32 %v2304, %v2316
    %v2318 = vpop.f32.mrf.mxu0
    %2319 = vdwg.mxu0
    %2320 = vmatpush.bf16.msra.mxu0 %v2155
    %2321 = vmatpush.bf16.msra.mxu0 %v2153
    %2322 = vmatpush.bf16.msra.mxu0 %v2151
    %2323 = vmatpush.bf16.msra.mxu0 %v2149
    %2324 = vmatpush.bf16.msra.mxu0 %v2147
    %2325 = vmatpush.bf16.msra.mxu0 %v2145
    %2326 = vmatpush.bf16.msra.mxu0 %v2143
    %2327 = vmatpush.bf16.msra.mxu0 %v2141
    %2328 = vmatmul.bf16.gmra.mxu0 %v1874
    %v2329 = vpop.f32.mrf.mxu0
    %v2330 = vadd.f32 %v1945, %v2329
    %v2331 = vpop.f32.mrf.mxu0
    %2332 = vdwg.mxu0
    %2333 = vmatpush.bf16.msra.mxu0 %v2171
    %2334 = vmatpush.bf16.msra.mxu0 %v2169
    %2335 = vmatpush.bf16.msra.mxu0 %v2167
    %2336 = vmatpush.bf16.msra.mxu0 %v2165
    %2337 = vmatpush.bf16.msra.mxu0 %v2163
    %2338 = vmatpush.bf16.msra.mxu0 %v2161
    %2339 = vmatpush.bf16.msra.mxu0 %v2159
    %2340 = vmatpush.bf16.msra.mxu0 %v2157
    %2341 = vmatmul.bf16.gmra.mxu0 %v1875
    %v2342 = vpop.f32.mrf.mxu0
    %v2343 = vadd.f32 %v2330, %v2342
    %v2344 = vpop.f32.mrf.mxu0
    %2345 = vdwg.mxu0
    %2346 = vmatpush.bf16.msra.mxu0 %v2187
    %2347 = vmatpush.bf16.msra.mxu0 %v2185
    %2348 = vmatpush.bf16.msra.mxu0 %v2183
    %2349 = vmatpush.bf16.msra.mxu0 %v2181
    %2350 = vmatpush.bf16.msra.mxu0 %v2179
    %2351 = vmatpush.bf16.msra.mxu0 %v2177
    %2352 = vmatpush.bf16.msra.mxu0 %v2175
    %2353 = vmatpush.bf16.msra.mxu0 %v2173
    %2354 = vmatmul.bf16.gmra.mxu0 %v1876
    %v2355 = vpop.f32.mrf.mxu0
    %v2356 = vadd.f32 %v2343, %v2355
    %v2357 = vpop.f32.mrf.mxu0
    %2358 = vdwg.mxu0
    %2359 = vmatpush.bf16.msra.mxu0 %v2203
    %2360 = vmatpush.bf16.msra.mxu0 %v2201
    %2361 = vmatpush.bf16.msra.mxu0 %v2199
    %2362 = vmatpush.bf16.msra.mxu0 %v2197
    %2363 = vmatpush.bf16.msra.mxu0 %v2195
    %2364 = vmatpush.bf16.msra.mxu0 %v2193
    %2365 = vmatpush.bf16.msra.mxu0 %v2191
    %2366 = vmatpush.bf16.msra.mxu0 %v2189
    %2367 = vmatmul.bf16.gmra.mxu0 %v1877
    %v2368 = vpop.f32.mrf.mxu0
    %v2369 = vadd.f32 %v2356, %v2368
    %v2370 = vpop.f32.mrf.mxu0
    %2371 = vdwg.mxu0
    %v2372 = vmax.f32 %v2317, 0.0
    %v2373 = vmax.f32 %v2369, 0.0
    %v2374 = vpack.c.bf16 %v2372, %v2372
    %v2375 = vpack.c.bf16 %v2373, %v2373
    %v2376 = vld [vmem:[#allocation10] sm:$0xf]
    %v2377 = vld [vmem:[#allocation10 + $0x4] sm:$0xf]
    %v2378 = vld [vmem:[#allocation10 + $0x8] sm:$0xf]
    %v2379 = vld [vmem:[#allocation10 + $0xc] sm:$0xf]
    %v2380 = vld [vmem:[#allocation10 + $0x10] sm:$0xf]
    %v2381 = vld [vmem:[#allocation10 + $0x14] sm:$0xf]
    %v2382 = vld [vmem:[#allocation10 + $0x18] sm:$0xf]
    %v2383 = vld [vmem:[#allocation10 + $0x1c] sm:$0xf]
    %v2384 = vld [vmem:[#allocation10 + $0x20] sm:$0xf]
    %v2385 = vld [vmem:[#allocation10 + $0x24] sm:$0xf]
    %v2386 = vld [vmem:[#allocation10 + $0x28] sm:$0xf]
    %v2387 = vld [vmem:[#allocation10 + $0x2c] sm:$0xf]
    %v2388 = vld [vmem:[#allocation10 + $0x30] sm:$0xf]
    %v2389 = vld [vmem:[#allocation10 + $0x34] sm:$0xf]
    %v2390 = vld [vmem:[#allocation10 + $0x38] sm:$0xf]
    %v2391 = vld [vmem:[#allocation10 + $0x3c] sm:$0xf]
    %v2392 = vld [vmem:[#allocation10 + $0x40] sm:$0xf]
    %v2393 = vld [vmem:[#allocation10 + $0x44] sm:$0xf]
    %v2394 = vld [vmem:[#allocation10 + $0x48] sm:$0xf]
    %v2395 = vld [vmem:[#allocation10 + $0x4c] sm:$0xf]
    %v2396 = vld [vmem:[#allocation10 + $0x50] sm:$0xf]
    %v2397 = vld [vmem:[#allocation10 + $0x54] sm:$0xf]
    %v2398 = vld [vmem:[#allocation10 + $0x58] sm:$0xf]
    %v2399 = vld [vmem:[#allocation10 + $0x5c] sm:$0xf]
    %v2400 = vld [vmem:[#allocation10 + $0x60] sm:$0xf]
    %v2401 = vld [vmem:[#allocation10 + $0x64] sm:$0xf]
    %v2402 = vld [vmem:[#allocation10 + $0x68] sm:$0xf]
    %v2403 = vld [vmem:[#allocation10 + $0x6c] sm:$0xf]
    %v2404 = vld [vmem:[#allocation10 + $0x70] sm:$0xf]
    %v2405 = vld [vmem:[#allocation10 + $0x74] sm:$0xf]
    %v2406 = vld [vmem:[#allocation10 + $0x78] sm:$0xf]
    %v2407 = vld [vmem:[#allocation10 + $0x7c] sm:$0xf]
    %v2408 = vld [vmem:[%s6] sm:$0x1]
    %v2410 = vperm.slane %v2408, 0
    %v2444 = vunpack.c.l.b16 %v2376
    %v2445 = vunpack.c.l.b16 %v2377
    %v2446 = vunpack.c.l.b16 %v2378
    %v2447 = vunpack.c.l.b16 %v2379
    %v2448 = vunpack.c.l.b16 %v2380
    %v2449 = vunpack.c.l.b16 %v2381
    %v2450 = vunpack.c.l.b16 %v2382
    %v2451 = vunpack.c.l.b16 %v2383
    %v2452 = vunpack.c.l.b16 %v2384
    %v2453 = vunpack.c.l.b16 %v2385
    %v2454 = vunpack.c.l.b16 %v2386
    %v2455 = vunpack.c.l.b16 %v2387
    %v2456 = vunpack.c.l.b16 %v2388
    %v2457 = vunpack.c.l.b16 %v2389
    %v2458 = vunpack.c.l.b16 %v2390
    %v2459 = vunpack.c.l.b16 %v2391
    %v2460 = vunpack.c.l.b16 %v2392
    %v2461 = vunpack.c.l.b16 %v2393
    %v2462 = vunpack.c.l.b16 %v2394
    %v2463 = vunpack.c.l.b16 %v2395
    %v2464 = vunpack.c.l.b16 %v2396
    %v2465 = vunpack.c.l.b16 %v2397
    %v2466 = vunpack.c.l.b16 %v2398
    %v2467 = vunpack.c.l.b16 %v2399
    %v2468 = vunpack.c.l.b16 %v2400
    %v2469 = vunpack.c.l.b16 %v2401
    %v2470 = vunpack.c.l.b16 %v2402
    %v2471 = vunpack.c.l.b16 %v2403
    %v2472 = vunpack.c.l.b16 %v2404
    %v2473 = vunpack.c.l.b16 %v2405
    %v2474 = vunpack.c.l.b16 %v2406
    %v2475 = vunpack.c.l.b16 %v2407
    %v2476 = vpack.c.b16 %v2445, %v2444
    %v2477 = vpack.c.b16 %v2447, %v2446
    %v2478 = vpack.c.b16 %v2449, %v2448
    %v2479 = vpack.c.b16 %v2451, %v2450
    %v2480 = vpack.c.b16 %v2453, %v2452
    %v2481 = vpack.c.b16 %v2455, %v2454
    %v2482 = vpack.c.b16 %v2457, %v2456
    %v2483 = vpack.c.b16 %v2459, %v2458
    %v2484 = vpack.c.b16 %v2461, %v2460
    %v2485 = vpack.c.b16 %v2463, %v2462
    %v2486 = vpack.c.b16 %v2465, %v2464
    %v2487 = vpack.c.b16 %v2467, %v2466
    %v2488 = vpack.c.b16 %v2469, %v2468
    %v2489 = vpack.c.b16 %v2471, %v2470
    %v2490 = vpack.c.b16 %v2473, %v2472
    %v2491 = vpack.c.b16 %v2475, %v2474
    %2508 = vmatpush.bf16.msra.mxu0 %v2483
    %2509 = vmatpush.bf16.msra.mxu0 %v2482
    %2510 = vmatpush.bf16.msra.mxu0 %v2481
    %2511 = vmatpush.bf16.msra.mxu0 %v2480
    %2512 = vmatpush.bf16.msra.mxu0 %v2479
    %2513 = vmatpush.bf16.msra.mxu0 %v2478
    %2514 = vmatpush.bf16.msra.mxu0 %v2477
    %2515 = vmatpush.bf16.msra.mxu0 %v2476
    %2516 = vmatmul.bf16.gmra.mxu0 %v2374
    %v2517 = vpop.f32.mrf.mxu0
    %v2518 = vadd.f32 %v2410, %v2517
    %v2519 = vpop.f32.mrf.mxu0
    %2520 = vdwg.mxu0
    %2521 = vmatpush.bf16.msra.mxu0 %v2491
    %2522 = vmatpush.bf16.msra.mxu0 %v2490
    %2523 = vmatpush.bf16.msra.mxu0 %v2489
    %2524 = vmatpush.bf16.msra.mxu0 %v2488
    %2525 = vmatpush.bf16.msra.mxu0 %v2487
    %2526 = vmatpush.bf16.msra.mxu0 %v2486
    %2527 = vmatpush.bf16.msra.mxu0 %v2485
    %2528 = vmatpush.bf16.msra.mxu0 %v2484
    %2529 = vmatmul.bf16.gmra.mxu0 %v2375
    %v2530 = vpop.f32.mrf.mxu0
    %v2531 = vadd.f32 %v2518, %v2530
    %v2532 = vpop.f32.mrf.mxu0
    %2533 = vdwg.mxu0
    %v2534 = vmax.f32 %v2531, 0.0
    %v2535 = vpack.c.bf16 %v2534, %v2534
    %v2536 = vld [vmem:[#allocation11] sm:$0xf]
    %v2537 = vld [vmem:[#allocation11 + $0x4] sm:$0xf]
    %v2538 = vld [vmem:[#allocation11 + $0x8] sm:$0xf]
    %v2539 = vld [vmem:[#allocation11 + $0xc] sm:$0xf]
    %v2540 = vld [vmem:[#allocation11 + $0x10] sm:$0xf]
    %v2541 = vld [vmem:[#allocation11 + $0x14] sm:$0xf]
    %v2542 = vld [vmem:[#allocation11 + $0x18] sm:$0xf]
    %v2543 = vld [vmem:[#allocation11 + $0x1c] sm:$0xf]
    %v2544 = vld [vmem:[#allocation11 + $0x20] sm:$0xf]
    %v2545 = vld [vmem:[#allocation11 + $0x24] sm:$0xf]
    %v2546 = vld [vmem:[#allocation11 + $0x28] sm:$0xf]
    %v2547 = vld [vmem:[#allocation11 + $0x2c] sm:$0xf]
    %v2548 = vld [vmem:[#allocation11 + $0x30] sm:$0xf]
    %v2549 = vld [vmem:[#allocation11 + $0x34] sm:$0xf]
    %v2550 = vld [vmem:[#allocation11 + $0x38] sm:$0xf]
    %v2551 = vld [vmem:[#allocation11 + $0x3c] sm:$0xf]
    %v2552 = vld [vmem:[%s8] sm:$0x1]
    %v2554 = vperm.slane %v2552, 0
    %v2572 = vunpack.c.l.b16 %v2536
    %v2573 = vunpack.c.l.b16 %v2537
    %v2574 = vunpack.c.l.b16 %v2538
    %v2575 = vunpack.c.l.b16 %v2539
    %v2576 = vunpack.c.l.b16 %v2540
    %v2577 = vunpack.c.l.b16 %v2541
    %v2578 = vunpack.c.l.b16 %v2542
    %v2579 = vunpack.c.l.b16 %v2543
    %v2580 = vunpack.c.l.b16 %v2544
    %v2581 = vunpack.c.l.b16 %v2545
    %v2582 = vunpack.c.l.b16 %v2546
    %v2583 = vunpack.c.l.b16 %v2547
    %v2584 = vunpack.c.l.b16 %v2548
    %v2585 = vunpack.c.l.b16 %v2549
    %v2586 = vunpack.c.l.b16 %v2550
    %v2587 = vunpack.c.l.b16 %v2551
    %v2588 = vpack.c.b16 %v2573, %v2572
    %v2589 = vpack.c.b16 %v2575, %v2574
    %v2590 = vpack.c.b16 %v2577, %v2576
    %v2591 = vpack.c.b16 %v2579, %v2578
    %v2592 = vpack.c.b16 %v2581, %v2580
    %v2593 = vpack.c.b16 %v2583, %v2582
    %v2594 = vpack.c.b16 %v2585, %v2584
    %v2595 = vpack.c.b16 %v2587, %v2586
    %2604 = vmatpush.bf16.msra.mxu0 %v2595
    %2605 = vmatpush.bf16.msra.mxu0 %v2594
    %2606 = vmatpush.bf16.msra.mxu0 %v2593
    %2607 = vmatpush.bf16.msra.mxu0 %v2592
    %2608 = vmatpush.bf16.msra.mxu0 %v2591
    %2609 = vmatpush.bf16.msra.mxu0 %v2590
    %2610 = vmatpush.bf16.msra.mxu0 %v2589
    %2611 = vmatpush.bf16.msra.mxu0 %v2588
    %2612 = vmatmul.bf16.gmra.mxu0 %v2535
    %v2613 = vpop.f32.mrf.mxu0
    %v2614 = vadd.f32 %v2554, %v2613
    %v2615 = vpop.f32.mrf.mxu0
    %2616 = vdwg.mxu0
    %2617 = vst [vmem:[#allocation13] sm:$0xff] %v2614
    // Predicated region
    $region62: #{tpu_custom_call.1} parent=1 // pred_check
      _
    $region63: #{tpu_custom_call.1} parent=1 // pred_check_branch
      %2619 = sbr.rel (0) target = $region65
    $region64: #{tpu_custom_call.1} parent=1 // pred_region
      %2621 = vsyncadd [#allocation4], 0
      %s2623 = sshll.u32 [#allocation13], 4
      %s2624 = int_to_ptr.vmem [resolvable:$true] %s2623
      %s2625 = sshll.u32 %s9, 4
      %s2626 = int_to_ptr.hbm [resolvable:$true] %s2625
      %2628 = dma.vmem_to_hbm [thread:$0]  %s2624, 128, %s2626, [#allocation4]
    $region65: #{tpu_custom_call.1} parent=1 // pred_fallthru
      _
    // Predicated region
    $region66: #{tpu_custom_call.1} parent=1 // pred_check
      _
    $region67: #{tpu_custom_call.1} parent=1 // pred_check_branch
      %2630 = sbr.rel (0) target = $region69
    $region68: #{tpu_custom_call.1} parent=1 // pred_region
      %2632 = dma.done [#allocation4], 128
    $region69: #{tpu_custom_call.1} parent=1 // pred_fallthru
      _
    %2633 = vsyncpa [#allocation3], 1
    %2634 = vsyncpa [#allocation6], 1
    %2635 = vsyncpa [#allocation9], 1
    %2636 = vsyncpa [#allocation12], 1
    %2637 = vsyncpa [#allocation4], 1

</llo_original>
